<compile_context>
chip_gen: v5e
topology: v5e:2x2
jax: 0.10.0
libtpu: 0.0.40
codegen_flags: <defaults>
</compile_context>

<pallas_src>
import jax
import jax.numpy as jnp
from jax.experimental import pallas as pl
from jax.experimental.pallas import tpu as pltpu


HIDDEN = 200            # middle TCN channel width: TemporalConvNet(V, [V, 200, V])
LANE = 128
SUBLANE = 8
TARGET_ROWS = 2048      # MXU M rows per grid step (v7x-safe activation working set)
VMEM_LIMIT_BYTES = 56 * 1024 * 1024


def _round_up(x, m):
    return (x + m - 1) // m * m


# ---------------------------------------------------------------------------
# Pallas kernel (closure over static sizes).
# ---------------------------------------------------------------------------
def _make_kernel(T_seg, V, Vp, Hp, M):
    """T_seg: padded segment length, V: real input lanes, M: rows per step."""
    pad_input = V != Vp

    def kernel(x_ref, w_ref, b_ref, o_ref, *scratch):
        b_all = b_ref[...]                                      # (8, Cmax) f32

        if pad_input:
            # Zero-pad the input lanes in VMEM (masked stores), so the wrapper
            # never materializes / reads a lane-padded copy from HBM.
            xpad = scratch[0]
            xpad[...] = jnp.zeros((M, Vp), jnp.float32)
            xpad[:, :V] = x_ref[...]
            x = xpad[...]
        else:
            x = x_ref[...]

        # Causal-shift mask column, hoisted: one iota + mod for the whole
        # kernel, one (M, 1) compare per dilation (reused by both convs).
        t = jax.lax.broadcasted_iota(jnp.int32, (M, 1), 0) % T_seg

        def shifted_bf16(h, d, mask):
            # Row r = b*T_seg + tt receives row r-d (same batch when tt >= d);
            # rows with tt < d are zeroed, so batches never leak into each
            # other and padded tail rows never feed real rows.
            rolled = pltpu.roll(h, d, 0)                        # XLU sublane roll (f32)
            return jnp.where(mask, rolled, 0.0).astype(jnp.bfloat16)

        def matmul(h_bf, iw, cin, cout):
            return jnp.dot(h_bf, w_ref[iw, :cin, :cout],
                           preferred_element_type=jnp.float32)

        def conv(h, h_bf, d, mask, iw, ib, cin, cout):
            # Causal k=2 dilated conv as two accumulated MXU matmuls:
            #   y[t] = h[t-d] @ w0 + h[t] @ w1 + b
            y = matmul(shifted_bf16(h, d, mask), iw, cin, cout)
            y = y + matmul(h_bf, iw + 1, cin, cout)
            return y + b_all[ib:ib + 1, :cout]

        def block(h, d, iw, ib, cin, cmid, cout, iw_down=None, ib_down=None):
            mask = t >= d
            h_bf = h.astype(jnp.bfloat16)                       # cast once per tensor
            z = jnp.maximum(conv(h, h_bf, d, mask, iw, ib, cin, cmid), 0.0)
            z_bf = z.astype(jnp.bfloat16)
            z = jnp.maximum(conv(z, z_bf, d, mask, iw + 2, ib + 1, cmid, cout), 0.0)
            if iw_down is None:
                res = h
            else:
                res = matmul(h_bf, iw_down, cin, cout) + b_all[ib_down:ib_down + 1, :cout]
            return jnp.maximum(z + res, 0.0)                    # block relu

        y = block(x, 1, 0, 0, Vp, Vp, Vp)                                  # V -> V
        y = block(y, 2, 4, 2, Vp, Hp, Hp, iw_down=8, ib_down=4)            # V -> 200
        y = block(y, 4, 9, 5, Hp, Vp, Vp, iw_down=13, ib_down=7)           # 200 -> V
        o_ref[...] = y.astype(o_ref.dtype)

    return kernel


# ---------------------------------------------------------------------------
# Parameter packing (done ONCE at init, not per forward call).
# Weights are stored as separate (Cmax, Cmax)-padded w0/w1 slices (no [w0;w1]
# stacking), so the kernel can issue two accumulated matmuls per conv.
# ---------------------------------------------------------------------------
def pack_params(params, n_vertex, hidden=HIDDEN):
    (w1a0, w1a1, b1a, w1b0, w1b1, b1b,
     w2a0, w2a1, b2a, w2b0, w2b1, b2b, wd2, bd2,
     w3a0, w3a1, b3a, w3b0, w3b1, b3b, wd3, bd3) = params

    Vp = _round_up(n_vertex, LANE)
    Hp = _round_up(hidden, LANE)
    Cmax = max(Vp, Hp)

    def pad2(w):
        return jnp.pad(w, ((0, Cmax - w.shape[0]), (0, Cmax - w.shape[1])))

    w_stack = jnp.stack([
        pad2(w1a0), pad2(w1a1),      # 0,1  : block1 conv1 (w0: x[t-d], w1: x[t])
        pad2(w1b0), pad2(w1b1),      # 2,3  : block1 conv2
        pad2(w2a0), pad2(w2a1),      # 4,5  : block2 conv1  V -> H
        pad2(w2b0), pad2(w2b1),      # 6,7  : block2 conv2  H -> H
        pad2(wd2),                   # 8    : block2 downsample V -> H
        pad2(w3a0), pad2(w3a1),      # 9,10 : block3 conv1  H -> V
        pad2(w3b0), pad2(w3b1),      # 11,12: block3 conv2  V -> V
        pad2(wd3),                   # 13   : block3 downsample H -> V
    ]).astype(jnp.bfloat16)                                    # (14, Cmax, Cmax)

    def padb(b):
        b = b.reshape(1, -1)
        return jnp.pad(b, ((0, 0), (0, Cmax - b.shape[-1])))

    b_stack = jnp.concatenate(
        [padb(b1a), padb(b1b), padb(b2a), padb(b2b),
         padb(bd2), padb(b3a), padb(b3b), padb(bd3)],
        axis=0).astype(jnp.float32)                            # (8, Cmax)
    return w_stack, b_stack


# ---------------------------------------------------------------------------
# Wrapper.
# ---------------------------------------------------------------------------
def stformer_forward(node_feature, packed, hidden=HIDDEN):
    """node_feature: (B, n_graph, n_vertex, n_feat) float32.
    packed: (w_stack, b_stack) from pack_params (built once at init).

    Returns cheack_in of shape (B, n_graph, n_vertex, 1), exactly like the
    PyTorch forward's return value (eval-mode dropout, weight-norm folded).
    """
    w_stack, b_stack = packed
    B, T, V, _ = node_feature.shape
    Vp = _round_up(V, LANE)
    Hp = _round_up(hidden, LANE)
    Cmax = max(Vp, Hp)
    assert w_stack.shape == (14, Cmax, Cmax) and b_stack.shape == (8, Cmax)

    # PyTorch: permute(0,2,1,3)[..., 0] gives (B, V, T) channels-first for
    # Conv1d. We keep channels on the lane (last) axis instead, (B, T, V),
    # which also folds the final .permute(0, 2, 1) into the output layout.
    x = node_feature[..., 0].astype(jnp.float32)               # (B, T, V)

    # Pad T to a multiple of 8 so every row-block satisfies the sublane rule
    # (padded tail rows never feed real rows through the causal shift and are
    # sliced off at the end).
    T_pad = _round_up(T, SUBLANE)
    if T_pad != T:
        x = jnp.pad(x, ((0, 0), (0, T_pad - T), (0, 0)))

    # Row budget per grid step: ~TARGET_ROWS rows keeps the 256-wide MXU fed
    # and amortizes the ~0.35us/step pipeline overhead, while the activation
    # working set stays inside v7x's 64 MiB VMEM.
    bb = max(1, min(B, TARGET_ROWS // T_pad))
    nb = -(-B // bb)
    # v7x has two TensorCores: give the "parallel" batch axis >= 2 steps
    # whenever each step still gets a decent M (>= 256 rows per TC).
    if nb == 1 and B >= 2 and B * T_pad >= 512:
        bb = -(-B // 2)
        nb = -(-B // bb)
    B_pad = nb * bb
    if B_pad != B:
        x = jnp.pad(x, ((0, B_pad - B), (0, 0), (0, 0)))

    M = bb * T_pad
    x = x.reshape(B_pad * T_pad, V)                            # flattened, unpadded lanes

    kernel = _make_kernel(T_pad, V, Vp, Hp, M)
    scratch = [pltpu.VMEM((M, Vp), jnp.float32)] if V != Vp else []

    # The weight/bias slabs are grid-invariant; once they are large enough for
    # double-buffering to matter for VMEM (Cmax >= 512 -> >= 14 MiB bf16 slab),
    # request single buffering.  At small Cmax keep the default pipelining.
    const_kwargs = dict(pipeline_mode=pl.Buffered(1)) if Cmax >= 512 else {}

    out = pl.pallas_call(
        kernel,
        out_shape=jax.ShapeDtypeStruct((B_pad * T_pad, Vp), jnp.float32),
        grid_spec=pltpu.PrefetchScalarGridSpec(
            num_scalar_prefetch=0,
            grid=(nb,),
            in_specs=[
                pl.BlockSpec((M, V), lambda i: (i, 0)),
                pl.BlockSpec((14, Cmax, Cmax), lambda i: (0, 0, 0), **const_kwargs),
                pl.BlockSpec((8, Cmax), lambda i: (0, 0), **const_kwargs),
            ],
            out_specs=pl.BlockSpec((M, Vp), lambda i: (i, 0)),
            scratch_shapes=scratch,
        ),
        compiler_params=pltpu.CompilerParams(
            dimension_semantics=("parallel",),
            vmem_limit_bytes=VMEM_LIMIT_BYTES,
        ),
    )(x, w_stack, b_stack)

    out = out.reshape(B_pad, T_pad, Vp)[:B, :T, :V]
    return out[..., None]                                      # (B, T, V, 1)


# ---------------------------------------------------------------------------
# Deterministic parameter construction (weight_norm folds to the raw weight).
# ---------------------------------------------------------------------------
def init_params(key, n_vertex, hidden=HIDDEN):
    V, H = n_vertex, hidden
    dims = [
        # block 1 (dilation 1): conv1 V->V, conv2 V->V   (no downsample)
        (V, V), (V, V), (1, V),
        (V, V), (V, V), (1, V),
        # block 2 (dilation 2): conv1 V->H, conv2 H->H, downsample V->H
        (V, H), (V, H), (1, H),
        (H, H), (H, H), (1, H),
        (V, H), (1, H),
        # block 3 (dilation 4): conv1 H->V, conv2 V->V, downsample H->V
        (H, V), (H, V), (1, V),
        (V, V), (V, V), (1, V),
        (H, V), (1, V),
    ]
    keys = jax.random.split(key, len(dims))
    # TCN's init_weights uses normal(0, 0.01) for conv weights.
    return [0.01 * jax.random.normal(k, s, jnp.float32) for k, s in zip(keys, dims)]


# ---------------------------------------------------------------------------
# Pure-JAX f32 reference (original, unfused, unpadded math).
# ---------------------------------------------------------------------------
def _causal_conv_k2_ref(x, w0, w1, b, d):
    T = x.shape[0]
    if d >= T:
        x_shift = jnp.zeros_like(x)
    else:
        x_shift = jnp.concatenate(
            [jnp.zeros((d, x.shape[1]), x.dtype), x[: T - d, :]], axis=0)
    return x_shift @ w0 + x @ w1 + b


def _temporal_block_ref(x, wa0, wa1, ba, wb0, wb1, bb_, d, wd=None, bd=None):
    h = jnp.maximum(_causal_conv_k2_ref(x, wa0, wa1, ba, d), 0.0)
    h = jnp.maximum(_causal_conv_k2_ref(h, wb0, wb1, bb_, d), 0.0)
    res = x if wd is None else x @ wd + bd
    return jnp.maximum(h + res, 0.0)


def _tcn_in_ref(x, p):
    (w1a0, w1a1, b1a, w1b0, w1b1, b1b,
     w2a0, w2a1, b2a, w2b0, w2b1, b2b, wd2, bd2,
     w3a0, w3a1, b3a, w3b0, w3b1, b3b, wd3, bd3) = p
    x = _temporal_block_ref(x, w1a0, w1a1, b1a, w1b0, w1b1, b1b, d=1)
    x = _temporal_block_ref(x, w2a0, w2a1, b2a, w2b0, w2b1, b2b, d=2, wd=wd2, bd=bd2)
    x = _temporal_block_ref(x, w3a0, w3a1, b3a, w3b0, w3b1, b3b, d=4, wd=wd3, bd=bd3)
    return x


def stformer_reference(node_feature, params):
    x = node_feature[..., 0].astype(jnp.float32)               # (B, T, V)
    y = jax.vmap(lambda xb: _tcn_in_ref(xb, params))(x)
    return y[..., None]


if __name__ == "__main__":
    B, N_GRAPH, N_VERTEX, N_FEAT = 2, 8, 16, 2

    key = jax.random.PRNGKey(0)
    k_x, k_p = jax.random.split(key)
    node_feature = jax.random.normal(
        k_x, (B, N_GRAPH, N_VERTEX, N_FEAT), jnp.float32)
    params = init_params(k_p, N_VERTEX)

    # Pack weights once (init-time), outside the per-call path.
    packed = pack_params(params, N_VERTEX)

    forward = jax.jit(stformer_forward)
    out = jax.block_until_ready(forward(node_feature, packed))
    ref = jax.block_until_ready(stformer_reference(node_feature, params))

    assert out.shape == (B, N_GRAPH, N_VERTEX, 1), out.shape
    # bf16 MXU inputs with f32 accumulation vs a pure-f32 reference: expected
    # error is ~1e-4 on outputs of ~1e-2 scale, so this tolerance is safe while
    # still catching structural bugs (wrong shift, wrong weight slice, etc.).
    max_err = float(jnp.max(jnp.abs(out - ref)))
    assert jnp.allclose(out, ref, rtol=2e-2, atol=2e-3), max_err

    print("KERNEL_OK")
</pallas_src>

<mosaic_0001>
module attributes {stable_mosaic.version = 11 : i64} {
  func.func @kernel(%arg0: i32, %arg1: memref<16x16xf32, #tpu.memory_space<vmem>>, %arg2: memref<14x256x256xbf16, #tpu.memory_space<vmem>>, %arg3: memref<8x256xf32, #tpu.memory_space<vmem>>, %arg4: memref<16x128xf32, #tpu.memory_space<vmem>>, %arg5: memref<16x128xf32, #tpu.memory_space<vmem>>) attributes {dimension_semantics = [#tpu.dimension_semantics<parallel>], iteration_bounds = array<i64: 1>, scalar_prefetch = 0 : i64, scratch_operands = 1 : i64, tpu.core_type = #tpu.core_type<tc>, window_params = [{transform_indices = @transform_0, window_bounds = array<i64: 16, 16>}, {pipeline_mode = #tpu.pipeline_mode<synchronous>, transform_indices = @transform_1, window_bounds = array<i64: 14, 256, 256>}, {pipeline_mode = #tpu.pipeline_mode<synchronous>, transform_indices = @transform_2, window_bounds = array<i64: 8, 256>}, {transform_indices = @transform_3, window_bounds = array<i64: 16, 128>}]} {
    %c0 = arith.constant 0 : index
    %c0_0 = arith.constant 0 : index
    %0 = vector.load %arg3[%c0, %c0_0] : memref<8x256xf32, #tpu.memory_space<vmem>>, vector<8x256xf32>
    %cst = arith.constant 0.000000e+00 : f32
    %1 = vector.broadcast %cst : f32 to vector<16x128xf32>
    %c0_1 = arith.constant 0 : index
    %c0_2 = arith.constant 0 : index
    %2 = vector.load %arg5[%c0_1, %c0_2] : memref<16x128xf32, #tpu.memory_space<vmem>>, vector<16x128xf32>
    tpu.vector_store %arg5[%c0_1, %c0_2], %1 {strides = array<i32>} : memref<16x128xf32, #tpu.memory_space<vmem>>, vector<16x128xf32>,
    %c0_3 = arith.constant 0 : index
    %c0_4 = arith.constant 0 : index
    %3 = vector.load %arg1[%c0_3, %c0_4] : memref<16x16xf32, #tpu.memory_space<vmem>>, vector<16x16xf32>
    %c0_5 = arith.constant 0 : index
    %c0_6 = arith.constant 0 : index
    %4 = vector.load %arg5[%c0_5, %c0_6] : memref<16x128xf32, #tpu.memory_space<vmem>>, vector<16x16xf32>
    tpu.vector_store %arg5[%c0_5, %c0_6], %3 {strides = array<i32>} : memref<16x128xf32, #tpu.memory_space<vmem>>, vector<16x16xf32>,
    %c0_7 = arith.constant 0 : index
    %c0_8 = arith.constant 0 : index
    %5 = vector.load %arg5[%c0_7, %c0_8] : memref<16x128xf32, #tpu.memory_space<vmem>>, vector<16x128xf32>
    %6 = tpu.iota {dimensions = array<i32: 0>} : vector<16x1xi32>
    %c8_i32 = arith.constant 8 : i32
    %c0_i32 = arith.constant 0 : i32
    %7 = arith.cmpi eq, %c8_i32, %c0_i32 : i32
    %c1_i32 = arith.constant 1 : i32
    %8 = arith.select %7, %c1_i32, %c8_i32 : i32
    %9 = vector.broadcast %8 : i32 to vector<16x1xi32>
    %10 = arith.remsi %6, %9 : vector<16x1xi32>
    %c0_i32_9 = arith.constant 0 : i32
    %11 = vector.broadcast %c0_i32_9 : i32 to vector<16x1xi32>
    %12 = arith.cmpi ne, %10, %11 : vector<16x1xi32>
    %c0_i32_10 = arith.constant 0 : i32
    %13 = vector.broadcast %c0_i32_10 : i32 to vector<16x1xi32>
    %14 = arith.cmpi slt, %10, %13 : vector<16x1xi32>
    %c0_i32_11 = arith.constant 0 : i32
    %15 = arith.cmpi slt, %8, %c0_i32_11 : i32
    %16 = vector.broadcast %15 : i1 to vector<16x1xi1>
    %17 = vector.broadcast %16 : vector<16x1xi1> to vector<16x1xi1>
    %18 = arith.xori %14, %17 : vector<16x1xi1>
    %19 = arith.andi %18, %12 : vector<16x1xi1>
    %20 = vector.broadcast %8 : i32 to vector<16x1xi32>
    %21 = arith.addi %10, %20 : vector<16x1xi32>
    %22 = arith.select %19, %21, %10 : vector<16x1xi1>, vector<16x1xi32>
    %c1_i32_12 = arith.constant 1 : i32
    %23 = vector.broadcast %c1_i32_12 : i32 to vector<16x1xi32>
    %24 = arith.cmpi sge, %22, %23 : vector<16x1xi32>
    %25 = arith.truncf %5 : vector<16x128xf32> to vector<16x128xbf16>
    %c1_i32_13 = arith.constant 1 : i32
    %26 = tpu.dynamic_rotate %5 by %c1_i32_13 dim 0 : vector<16x128xf32>, i32 -> vector<16x128xf32>
    %cst_14 = arith.constant 0.000000e+00 : f32
    %27 = vector.shape_cast %24 : vector<16x1xi1> to vector<16x1xi1>
    %28 = vector.broadcast %27 : vector<16x1xi1> to vector<16x128xi1>
    %29 = vector.broadcast %cst_14 : f32 to vector<16x128xf32>
    %30 = arith.select %28, %26, %29 : vector<16x128xi1>, vector<16x128xf32>
    %31 = arith.truncf %30 : vector<16x128xf32> to vector<16x128xbf16>
    %c0_15 = arith.constant 0 : index
    %c0_16 = arith.constant 0 : index
    %c0_17 = arith.constant 0 : index
    %32 = vector.load %arg2[%c0_15, %c0_16, %c0_17] : memref<14x256x256xbf16, #tpu.memory_space<vmem>>, vector<1x128x128xbf16>
    %33 = vector.shape_cast %32 : vector<1x128x128xbf16> to vector<128x128xbf16>
    %cst_18 = arith.constant dense<0.000000e+00> : vector<16x128xf32>
    %34 = tpu.matmul %31, %33, %cst_18 {dimension_numbers = #tpu.dot_dimension_numbers<[1], [0], [0], [1], [0, 0, 1, 1], [], []>} : vector<16x128xbf16>, vector<128x128xbf16>, vector<16x128xf32> -> vector<16x128xf32>
    %c1 = arith.constant 1 : index
    %c0_19 = arith.constant 0 : index
    %c0_20 = arith.constant 0 : index
    %35 = vector.load %arg2[%c1, %c0_19, %c0_20] : memref<14x256x256xbf16, #tpu.memory_space<vmem>>, vector<1x128x128xbf16>
    %36 = vector.shape_cast %35 : vector<1x128x128xbf16> to vector<128x128xbf16>
    %cst_21 = arith.constant dense<0.000000e+00> : vector<16x128xf32>
    %37 = tpu.matmul %25, %36, %cst_21 {dimension_numbers = #tpu.dot_dimension_numbers<[1], [0], [0], [1], [0, 0, 1, 1], [], []>} : vector<16x128xbf16>, vector<128x128xbf16>, vector<16x128xf32> -> vector<16x128xf32>
    %38 = arith.addf %34, %37 : vector<16x128xf32>
    %39 = vector.extract_strided_slice %0 {offsets = [0, 0], sizes = [1, 128], strides = [1, 1]} : vector<8x256xf32> to vector<1x128xf32>
    %40 = vector.broadcast %39 : vector<1x128xf32> to vector<16x128xf32>
    %41 = arith.addf %38, %40 : vector<16x128xf32>
    %cst_22 = arith.constant 0.000000e+00 : f32
    %42 = vector.broadcast %cst_22 : f32 to vector<16x128xf32>
    %43 = arith.maximumf %41, %42 : vector<16x128xf32>
    %44 = arith.truncf %43 : vector<16x128xf32> to vector<16x128xbf16>
    %c1_i32_23 = arith.constant 1 : i32
    %45 = tpu.dynamic_rotate %43 by %c1_i32_23 dim 0 : vector<16x128xf32>, i32 -> vector<16x128xf32>
    %cst_24 = arith.constant 0.000000e+00 : f32
    %46 = vector.shape_cast %24 : vector<16x1xi1> to vector<16x1xi1>
    %47 = vector.broadcast %46 : vector<16x1xi1> to vector<16x128xi1>
    %48 = vector.broadcast %cst_24 : f32 to vector<16x128xf32>
    %49 = arith.select %47, %45, %48 : vector<16x128xi1>, vector<16x128xf32>
    %50 = arith.truncf %49 : vector<16x128xf32> to vector<16x128xbf16>
    %c2 = arith.constant 2 : index
    %c0_25 = arith.constant 0 : index
    %c0_26 = arith.constant 0 : index
    %51 = vector.load %arg2[%c2, %c0_25, %c0_26] : memref<14x256x256xbf16, #tpu.memory_space<vmem>>, vector<1x128x128xbf16>
    %52 = vector.shape_cast %51 : vector<1x128x128xbf16> to vector<128x128xbf16>
    %cst_27 = arith.constant dense<0.000000e+00> : vector<16x128xf32>
    %53 = tpu.matmul %50, %52, %cst_27 {dimension_numbers = #tpu.dot_dimension_numbers<[1], [0], [0], [1], [0, 0, 1, 1], [], []>} : vector<16x128xbf16>, vector<128x128xbf16>, vector<16x128xf32> -> vector<16x128xf32>
    %c3 = arith.constant 3 : index
    %c0_28 = arith.constant 0 : index
    %c0_29 = arith.constant 0 : index
    %54 = vector.load %arg2[%c3, %c0_28, %c0_29] : memref<14x256x256xbf16, #tpu.memory_space<vmem>>, vector<1x128x128xbf16>
    %55 = vector.shape_cast %54 : vector<1x128x128xbf16> to vector<128x128xbf16>
    %cst_30 = arith.constant dense<0.000000e+00> : vector<16x128xf32>
    %56 = tpu.matmul %44, %55, %cst_30 {dimension_numbers = #tpu.dot_dimension_numbers<[1], [0], [0], [1], [0, 0, 1, 1], [], []>} : vector<16x128xbf16>, vector<128x128xbf16>, vector<16x128xf32> -> vector<16x128xf32>
    %57 = arith.addf %53, %56 : vector<16x128xf32>
    %58 = vector.extract_strided_slice %0 {offsets = [1, 0], sizes = [1, 128], strides = [1, 1]} : vector<8x256xf32> to vector<1x128xf32>
    %59 = vector.broadcast %58 : vector<1x128xf32> to vector<16x128xf32>
    %60 = arith.addf %57, %59 : vector<16x128xf32>
    %cst_31 = arith.constant 0.000000e+00 : f32
    %61 = vector.broadcast %cst_31 : f32 to vector<16x128xf32>
    %62 = arith.maximumf %60, %61 : vector<16x128xf32>
    %63 = arith.addf %62, %5 : vector<16x128xf32>
    %cst_32 = arith.constant 0.000000e+00 : f32
    %64 = vector.broadcast %cst_32 : f32 to vector<16x128xf32>
    %65 = arith.maximumf %63, %64 : vector<16x128xf32>
    %c2_i32 = arith.constant 2 : i32
    %66 = vector.broadcast %c2_i32 : i32 to vector<16x1xi32>
    %67 = arith.cmpi sge, %22, %66 : vector<16x1xi32>
    %68 = arith.truncf %65 : vector<16x128xf32> to vector<16x128xbf16>
    %c2_i32_33 = arith.constant 2 : i32
    %69 = tpu.dynamic_rotate %65 by %c2_i32_33 dim 0 : vector<16x128xf32>, i32 -> vector<16x128xf32>
    %cst_34 = arith.constant 0.000000e+00 : f32
    %70 = vector.shape_cast %67 : vector<16x1xi1> to vector<16x1xi1>
    %71 = vector.broadcast %70 : vector<16x1xi1> to vector<16x128xi1>
    %72 = vector.broadcast %cst_34 : f32 to vector<16x128xf32>
    %73 = arith.select %71, %69, %72 : vector<16x128xi1>, vector<16x128xf32>
    %74 = arith.truncf %73 : vector<16x128xf32> to vector<16x128xbf16>
    %c4 = arith.constant 4 : index
    %c0_35 = arith.constant 0 : index
    %c0_36 = arith.constant 0 : index
    %75 = vector.load %arg2[%c4, %c0_35, %c0_36] : memref<14x256x256xbf16, #tpu.memory_space<vmem>>, vector<1x128x256xbf16>
    %76 = vector.shape_cast %75 : vector<1x128x256xbf16> to vector<128x256xbf16>
    %cst_37 = arith.constant dense<0.000000e+00> : vector<16x256xf32>
    %77 = tpu.matmul %74, %76, %cst_37 {dimension_numbers = #tpu.dot_dimension_numbers<[1], [0], [0], [1], [0, 0, 1, 1], [], []>} : vector<16x128xbf16>, vector<128x256xbf16>, vector<16x256xf32> -> vector<16x256xf32>
    %c5 = arith.constant 5 : index
    %c0_38 = arith.constant 0 : index
    %c0_39 = arith.constant 0 : index
    %78 = vector.load %arg2[%c5, %c0_38, %c0_39] : memref<14x256x256xbf16, #tpu.memory_space<vmem>>, vector<1x128x256xbf16>
    %79 = vector.shape_cast %78 : vector<1x128x256xbf16> to vector<128x256xbf16>
    %cst_40 = arith.constant dense<0.000000e+00> : vector<16x256xf32>
    %80 = tpu.matmul %68, %79, %cst_40 {dimension_numbers = #tpu.dot_dimension_numbers<[1], [0], [0], [1], [0, 0, 1, 1], [], []>} : vector<16x128xbf16>, vector<128x256xbf16>, vector<16x256xf32> -> vector<16x256xf32>
    %81 = arith.addf %77, %80 : vector<16x256xf32>
    %82 = vector.extract_strided_slice %0 {offsets = [2, 0], sizes = [1, 256], strides = [1, 1]} : vector<8x256xf32> to vector<1x256xf32>
    %83 = vector.broadcast %82 : vector<1x256xf32> to vector<16x256xf32>
    %84 = arith.addf %81, %83 : vector<16x256xf32>
    %cst_41 = arith.constant 0.000000e+00 : f32
    %85 = vector.broadcast %cst_41 : f32 to vector<16x256xf32>
    %86 = arith.maximumf %84, %85 : vector<16x256xf32>
    %87 = arith.truncf %86 : vector<16x256xf32> to vector<16x256xbf16>
    %c2_i32_42 = arith.constant 2 : i32
    %88 = tpu.dynamic_rotate %86 by %c2_i32_42 dim 0 : vector<16x256xf32>, i32 -> vector<16x256xf32>
    %cst_43 = arith.constant 0.000000e+00 : f32
    %89 = vector.shape_cast %67 : vector<16x1xi1> to vector<16x1xi1>
    %90 = vector.broadcast %89 : vector<16x1xi1> to vector<16x256xi1>
    %91 = vector.broadcast %cst_43 : f32 to vector<16x256xf32>
    %92 = arith.select %90, %88, %91 : vector<16x256xi1>, vector<16x256xf32>
    %93 = arith.truncf %92 : vector<16x256xf32> to vector<16x256xbf16>
    %c6 = arith.constant 6 : index
    %c0_44 = arith.constant 0 : index
    %c0_45 = arith.constant 0 : index
    %94 = vector.load %arg2[%c6, %c0_44, %c0_45] : memref<14x256x256xbf16, #tpu.memory_space<vmem>>, vector<1x256x256xbf16>
    %95 = vector.shape_cast %94 : vector<1x256x256xbf16> to vector<256x256xbf16>
    %cst_46 = arith.constant dense<0.000000e+00> : vector<16x256xf32>
    %96 = tpu.matmul %93, %95, %cst_46 {dimension_numbers = #tpu.dot_dimension_numbers<[1], [0], [0], [1], [0, 0, 1, 1], [], []>} : vector<16x256xbf16>, vector<256x256xbf16>, vector<16x256xf32> -> vector<16x256xf32>
    %c7 = arith.constant 7 : index
    %c0_47 = arith.constant 0 : index
    %c0_48 = arith.constant 0 : index
    %97 = vector.load %arg2[%c7, %c0_47, %c0_48] : memref<14x256x256xbf16, #tpu.memory_space<vmem>>, vector<1x256x256xbf16>
    %98 = vector.shape_cast %97 : vector<1x256x256xbf16> to vector<256x256xbf16>
    %cst_49 = arith.constant dense<0.000000e+00> : vector<16x256xf32>
    %99 = tpu.matmul %87, %98, %cst_49 {dimension_numbers = #tpu.dot_dimension_numbers<[1], [0], [0], [1], [0, 0, 1, 1], [], []>} : vector<16x256xbf16>, vector<256x256xbf16>, vector<16x256xf32> -> vector<16x256xf32>
    %100 = arith.addf %96, %99 : vector<16x256xf32>
    %101 = vector.extract_strided_slice %0 {offsets = [3, 0], sizes = [1, 256], strides = [1, 1]} : vector<8x256xf32> to vector<1x256xf32>
    %102 = vector.broadcast %101 : vector<1x256xf32> to vector<16x256xf32>
    %103 = arith.addf %100, %102 : vector<16x256xf32>
    %cst_50 = arith.constant 0.000000e+00 : f32
    %104 = vector.broadcast %cst_50 : f32 to vector<16x256xf32>
    %105 = arith.maximumf %103, %104 : vector<16x256xf32>
    %c8 = arith.constant 8 : index
    %c0_51 = arith.constant 0 : index
    %c0_52 = arith.constant 0 : index
    %106 = vector.load %arg2[%c8, %c0_51, %c0_52] : memref<14x256x256xbf16, #tpu.memory_space<vmem>>, vector<1x128x256xbf16>
    %107 = vector.shape_cast %106 : vector<1x128x256xbf16> to vector<128x256xbf16>
    %cst_53 = arith.constant dense<0.000000e+00> : vector<16x256xf32>
    %108 = tpu.matmul %68, %107, %cst_53 {dimension_numbers = #tpu.dot_dimension_numbers<[1], [0], [0], [1], [0, 0, 1, 1], [], []>} : vector<16x128xbf16>, vector<128x256xbf16>, vector<16x256xf32> -> vector<16x256xf32>
    %109 = vector.extract_strided_slice %0 {offsets = [4, 0], sizes = [1, 256], strides = [1, 1]} : vector<8x256xf32> to vector<1x256xf32>
    %110 = vector.broadcast %109 : vector<1x256xf32> to vector<16x256xf32>
    %111 = arith.addf %108, %110 : vector<16x256xf32>
    %112 = arith.addf %105, %111 : vector<16x256xf32>
    %cst_54 = arith.constant 0.000000e+00 : f32
    %113 = vector.broadcast %cst_54 : f32 to vector<16x256xf32>
    %114 = arith.maximumf %112, %113 : vector<16x256xf32>
    %c4_i32 = arith.constant 4 : i32
    %115 = vector.broadcast %c4_i32 : i32 to vector<16x1xi32>
    %116 = arith.cmpi sge, %22, %115 : vector<16x1xi32>
    %117 = arith.truncf %114 : vector<16x256xf32> to vector<16x256xbf16>
    %c4_i32_55 = arith.constant 4 : i32
    %118 = tpu.dynamic_rotate %114 by %c4_i32_55 dim 0 : vector<16x256xf32>, i32 -> vector<16x256xf32>
    %cst_56 = arith.constant 0.000000e+00 : f32
    %119 = vector.shape_cast %116 : vector<16x1xi1> to vector<16x1xi1>
    %120 = vector.broadcast %119 : vector<16x1xi1> to vector<16x256xi1>
    %121 = vector.broadcast %cst_56 : f32 to vector<16x256xf32>
    %122 = arith.select %120, %118, %121 : vector<16x256xi1>, vector<16x256xf32>
    %123 = arith.truncf %122 : vector<16x256xf32> to vector<16x256xbf16>
    %c9 = arith.constant 9 : index
    %c0_57 = arith.constant 0 : index
    %c0_58 = arith.constant 0 : index
    %124 = vector.load %arg2[%c9, %c0_57, %c0_58] : memref<14x256x256xbf16, #tpu.memory_space<vmem>>, vector<1x256x128xbf16>
    %125 = vector.shape_cast %124 : vector<1x256x128xbf16> to vector<256x128xbf16>
    %cst_59 = arith.constant dense<0.000000e+00> : vector<16x128xf32>
    %126 = tpu.matmul %123, %125, %cst_59 {dimension_numbers = #tpu.dot_dimension_numbers<[1], [0], [0], [1], [0, 0, 1, 1], [], []>} : vector<16x256xbf16>, vector<256x128xbf16>, vector<16x128xf32> -> vector<16x128xf32>
    %c10 = arith.constant 10 : index
    %c0_60 = arith.constant 0 : index
    %c0_61 = arith.constant 0 : index
    %127 = vector.load %arg2[%c10, %c0_60, %c0_61] : memref<14x256x256xbf16, #tpu.memory_space<vmem>>, vector<1x256x128xbf16>
    %128 = vector.shape_cast %127 : vector<1x256x128xbf16> to vector<256x128xbf16>
    %cst_62 = arith.constant dense<0.000000e+00> : vector<16x128xf32>
    %129 = tpu.matmul %117, %128, %cst_62 {dimension_numbers = #tpu.dot_dimension_numbers<[1], [0], [0], [1], [0, 0, 1, 1], [], []>} : vector<16x256xbf16>, vector<256x128xbf16>, vector<16x128xf32> -> vector<16x128xf32>
    %130 = arith.addf %126, %129 : vector<16x128xf32>
    %131 = vector.extract_strided_slice %0 {offsets = [5, 0], sizes = [1, 128], strides = [1, 1]} : vector<8x256xf32> to vector<1x128xf32>
    %132 = vector.broadcast %131 : vector<1x128xf32> to vector<16x128xf32>
    %133 = arith.addf %130, %132 : vector<16x128xf32>
    %cst_63 = arith.constant 0.000000e+00 : f32
    %134 = vector.broadcast %cst_63 : f32 to vector<16x128xf32>
    %135 = arith.maximumf %133, %134 : vector<16x128xf32>
    %136 = arith.truncf %135 : vector<16x128xf32> to vector<16x128xbf16>
    %c4_i32_64 = arith.constant 4 : i32
    %137 = tpu.dynamic_rotate %135 by %c4_i32_64 dim 0 : vector<16x128xf32>, i32 -> vector<16x128xf32>
    %cst_65 = arith.constant 0.000000e+00 : f32
    %138 = vector.shape_cast %116 : vector<16x1xi1> to vector<16x1xi1>
    %139 = vector.broadcast %138 : vector<16x1xi1> to vector<16x128xi1>
    %140 = vector.broadcast %cst_65 : f32 to vector<16x128xf32>
    %141 = arith.select %139, %137, %140 : vector<16x128xi1>, vector<16x128xf32>
    %142 = arith.truncf %141 : vector<16x128xf32> to vector<16x128xbf16>
    %c11 = arith.constant 11 : index
    %c0_66 = arith.constant 0 : index
    %c0_67 = arith.constant 0 : index
    %143 = vector.load %arg2[%c11, %c0_66, %c0_67] : memref<14x256x256xbf16, #tpu.memory_space<vmem>>, vector<1x128x128xbf16>
    %144 = vector.shape_cast %143 : vector<1x128x128xbf16> to vector<128x128xbf16>
    %cst_68 = arith.constant dense<0.000000e+00> : vector<16x128xf32>
    %145 = tpu.matmul %142, %144, %cst_68 {dimension_numbers = #tpu.dot_dimension_numbers<[1], [0], [0], [1], [0, 0, 1, 1], [], []>} : vector<16x128xbf16>, vector<128x128xbf16>, vector<16x128xf32> -> vector<16x128xf32>
    %c12 = arith.constant 12 : index
    %c0_69 = arith.constant 0 : index
    %c0_70 = arith.constant 0 : index
    %146 = vector.load %arg2[%c12, %c0_69, %c0_70] : memref<14x256x256xbf16, #tpu.memory_space<vmem>>, vector<1x128x128xbf16>
    %147 = vector.shape_cast %146 : vector<1x128x128xbf16> to vector<128x128xbf16>
    %cst_71 = arith.constant dense<0.000000e+00> : vector<16x128xf32>
    %148 = tpu.matmul %136, %147, %cst_71 {dimension_numbers = #tpu.dot_dimension_numbers<[1], [0], [0], [1], [0, 0, 1, 1], [], []>} : vector<16x128xbf16>, vector<128x128xbf16>, vector<16x128xf32> -> vector<16x128xf32>
    %149 = arith.addf %145, %148 : vector<16x128xf32>
    %150 = vector.extract_strided_slice %0 {offsets = [6, 0], sizes = [1, 128], strides = [1, 1]} : vector<8x256xf32> to vector<1x128xf32>
    %151 = vector.broadcast %150 : vector<1x128xf32> to vector<16x128xf32>
    %152 = arith.addf %149, %151 : vector<16x128xf32>
    %cst_72 = arith.constant 0.000000e+00 : f32
    %153 = vector.broadcast %cst_72 : f32 to vector<16x128xf32>
    %154 = arith.maximumf %152, %153 : vector<16x128xf32>
    %c13 = arith.constant 13 : index
    %c0_73 = arith.constant 0 : index
    %c0_74 = arith.constant 0 : index
    %155 = vector.load %arg2[%c13, %c0_73, %c0_74] : memref<14x256x256xbf16, #tpu.memory_space<vmem>>, vector<1x256x128xbf16>
    %156 = vector.shape_cast %155 : vector<1x256x128xbf16> to vector<256x128xbf16>
    %cst_75 = arith.constant dense<0.000000e+00> : vector<16x128xf32>
    %157 = tpu.matmul %117, %156, %cst_75 {dimension_numbers = #tpu.dot_dimension_numbers<[1], [0], [0], [1], [0, 0, 1, 1], [], []>} : vector<16x256xbf16>, vector<256x128xbf16>, vector<16x128xf32> -> vector<16x128xf32>
    %158 = vector.extract_strided_slice %0 {offsets = [7, 0], sizes = [1, 128], strides = [1, 1]} : vector<8x256xf32> to vector<1x128xf32>
    %159 = vector.broadcast %158 : vector<1x128xf32> to vector<16x128xf32>
    %160 = arith.addf %157, %159 : vector<16x128xf32>
    %161 = arith.addf %154, %160 : vector<16x128xf32>
    %cst_76 = arith.constant 0.000000e+00 : f32
    %162 = vector.broadcast %cst_76 : f32 to vector<16x128xf32>
    %163 = arith.maximumf %161, %162 : vector<16x128xf32>
    %c0_77 = arith.constant 0 : index
    %c0_78 = arith.constant 0 : index
    %164 = vector.load %arg4[%c0_77, %c0_78] : memref<16x128xf32, #tpu.memory_space<vmem>>, vector<16x128xf32>
    tpu.vector_store %arg4[%c0_77, %c0_78], %163 {strides = array<i32>} : memref<16x128xf32, #tpu.memory_space<vmem>>, vector<16x128xf32>,
    return
  }
  func.func @transform_0(%arg0: i32) -> (i32, i32) {
    %c0_i32 = arith.constant 0 : i32
    %c0_i32_0 = arith.constant 0 : i32
    return %arg0, %c0_i32 : i32, i32
  }
  func.func @transform_1(%arg0: i32) -> (i32, i32, i32) {
    %c0_i32 = arith.constant 0 : i32
    %c0_i32_0 = arith.constant 0 : i32
    %c0_i32_1 = arith.constant 0 : i32
    %c0_i32_2 = arith.constant 0 : i32
    return %c0_i32, %c0_i32_0, %c0_i32_1 : i32, i32, i32
  }
  func.func @transform_2(%arg0: i32) -> (i32, i32) {
    %c0_i32 = arith.constant 0 : i32
    %c0_i32_0 = arith.constant 0 : i32
    %c0_i32_1 = arith.constant 0 : i32
    return %c0_i32, %c0_i32_0 : i32, i32
  }
  func.func @transform_3(%arg0: i32) -> (i32, i32) {
    %c0_i32 = arith.constant 0 : i32
    %c0_i32_0 = arith.constant 0 : i32
    return %arg0, %c0_i32 : i32, i32
  }
}

</mosaic_0001>

<llo_original>
// kernel: stformer_forward.1
$region0: #{stformer_forward.1}
  #allocation0 [shape = 'u32[]', space=smem, size = 0x4, offset = 0x4, fixed_abs, tag = 'smem constant byte address 0x4 - core index']
  #allocation1 [shape = 'u32[72,128]{1,0:T(1,128)}', space=vmem, size = 0x9000, scoped, tag = 'internal scratch']
  #allocation2 [shape = 'f32[16,128]{1,0:T(8,128)}', space=vmem, size = 0x2000, scoped, tag = 'scratch operand']
  %s0 = inlined_call_operand.vmem [shape: f32[16,16], index: 0, kind: input, shape index: {}]
  %s1 = inlined_call_operand.hbm [shape: bf16[14,256,256], index: 1, kind: input, shape index: {}]
  %s2 = inlined_call_operand.hbm [shape: f32[8,256], index: 2, kind: input, shape index: {}]
  %s3 = inlined_call_operand.hbm [shape: f32[16,128], index: 3, kind: output, shape index: {}]
  %s4 = sld [smem:[#allocation0]]
  $region30: #{stformer_forward.1} parent=0
    _
  %s6 = ssub.s32 1, %s4
  %s7 = scalar_select 0, %s6, %s4
  $region1: #{stformer_forward.1} parent=0
    #allocation3 [shape = 'u8[1835008]{0}', space=vmem, size = 0x1c0000, scoped, tag = 'input window, operand 1, single buffered']
    #allocation4 [shape = 's32[1]{0}', space=sflag, size = 0x4, scoped, tag = 'scoped memory for stformer_forward.1']
    #allocation5 [shape = 's32[1]{0}', space=sflag, size = 0x4, scoped, tag = 'scoped memory for stformer_forward.1']
    #allocation6 [shape = 'u8[8192]{0}', space=vmem, size = 0x2000, scoped, tag = 'input window, operand 2, single buffered']
    #allocation7 [shape = 's32[1]{0}', space=sflag, size = 0x4, scoped, tag = 'scoped memory for stformer_forward.1']
    #allocation8 [shape = 'u8[8192]{0}', space=vmem, size = 0x2000, scoped, tag = 'output window, operand 0, single buffered']
    %8 = vsyncpa [#allocation4], 0
    %9 = vsyncpa [#allocation7], 0
    %10 = vsyncpa [#allocation5], 0
    // Predicated region
    $region2: #{stformer_forward.1} parent=1 // pred_check
      _
    $region3: #{stformer_forward.1} parent=1 // pred_check_branch
      %12 = sbr.rel (0) target = $region5
    $region4: #{stformer_forward.1} parent=1 // pred_region
      _
    $region5: #{stformer_forward.1} parent=1 // pred_fallthru
      _
    // Predicated region
    $region6: #{stformer_forward.1} parent=1 // pred_check
      _
    $region7: #{stformer_forward.1} parent=1 // pred_check_branch
      %14 = sbr.rel (0) target = $region9
    $region8: #{stformer_forward.1} parent=1 // pred_region
      %16 = vsyncadd [#allocation4], 0
      %s17 = sshll.u32 %s1, 4
      %s18 = int_to_ptr.hbm [resolvable:$true] %s17
      %s19 = sshll.u32 [#allocation3], 4
      %s20 = int_to_ptr.vmem [resolvable:$true] %s19
      %25 = dma.hbm_to_vmem [thread:$0]  %s18, 57344, %s20, [#allocation4], 128, 128, 8
    $region9: #{stformer_forward.1} parent=1 // pred_fallthru
      _
    // Predicated region
    $region10: #{stformer_forward.1} parent=1 // pred_check
      _
    $region11: #{stformer_forward.1} parent=1 // pred_check_branch
      %27 = sbr.rel (0) target = $region13
    $region12: #{stformer_forward.1} parent=1 // pred_region
      %29 = vsyncadd [#allocation7], 0
      %s31 = sshll.u32 %s2, 4
      %s32 = int_to_ptr.hbm [resolvable:$true] %s31
      %s33 = sshll.u32 [#allocation6], 4
      %s34 = int_to_ptr.vmem [resolvable:$true] %s33
      %36 = dma.hbm_to_vmem [thread:$0]  %s32, 256, %s34, [#allocation7]
    $region13: #{stformer_forward.1} parent=1 // pred_fallthru
      _
    // Predicated region
    $region14: #{stformer_forward.1} parent=1 // pred_check
      _
    $region15: #{stformer_forward.1} parent=1 // pred_check_branch
      %38 = sbr.rel (0) target = $region17
    $region16: #{stformer_forward.1} parent=1 // pred_region
      %40 = dma.done [#allocation4], 57344
    $region17: #{stformer_forward.1} parent=1 // pred_fallthru
      _
    // Predicated region
    $region18: #{stformer_forward.1} parent=1 // pred_check
      _
    $region19: #{stformer_forward.1} parent=1 // pred_check_branch
      %42 = sbr.rel (0) target = $region21
    $region20: #{stformer_forward.1} parent=1 // pred_region
      %44 = dma.done [#allocation7], 256
    $region21: #{stformer_forward.1} parent=1 // pred_fallthru
      _
    %v45 = vld [vmem:[#allocation6] sm:$0xff]
    %v46 = vld [vmem:[#allocation6 + $0x8] sm:$0xff]
    %47 = vst [vmem:[#allocation2] sm:$0xff] 0.0
    %48 = vst [vmem:[#allocation2 + $0x8] sm:$0xff] 0.0
    %v49 = vld [vmem:[%s0] sm:$0xff]
    %v50 = vld [vmem:[%s0 + $0x8] sm:$0xff]
    %vm51 = vcmask 130048
    %52 = vst.msk [vmem:[#allocation2] sm:$0xff] %vm51, %v49
    %53 = vst.msk [vmem:[#allocation2 + $0x8] sm:$0xff] %vm51, %v50
    %v54 = vld [vmem:[#allocation2] sm:$0xff]
    %v55 = vld [vmem:[#allocation2 + $0x8] sm:$0xff]
    %v56 = vlaneseq
    %v57 = vshrl.u32 %v56, 7
    %v58 = vadd.s32 %v57, 8
    %vm59 = vcmp.lt.s32.totalorder %v57, 0
    %v60 = vsub.s32 0, %v57
    %v61 = vsel %vm59, %v60, %v57
    %v62 = vshrl.u32 %v61, 3
    %v63 = vand.u32 %v61, 7
    %v64 = vsub.s32 0, %v63
    %v65 = vsel %vm59, %v64, %v63
    %vm66 = vcmp.lt.s32.totalorder %v58, 0
    %v67 = vsub.s32 0, %v58
    %v68 = vsel %vm66, %v67, %v58
    %v69 = vshrl.u32 %v68, 3
    %v70 = vand.u32 %v68, 7
    %v71 = vsub.s32 0, %v70
    %v72 = vsel %vm66, %v71, %v70
    %vm73 = vcmp.ne.s32.totalorder %v65, 0
    %vm74 = vcmp.ne.s32.totalorder %v72, 0
    %vm75 = vcmp.lt.s32.totalorder %v65, 0
    %vm76 = vcmp.lt.s32.totalorder %v72, 0
    %vm77 = vmand %vm75, %vm73
    %vm78 = vmand %vm76, %vm74
    %v79 = vadd.s32 %v65, 8
    %v80 = vadd.s32 %v72, 8
    %v81 = vsel %vm77, %v79, %v65
    %v82 = vsel %vm78, %v80, %v72
    %vm83 = vcmp.ge.s32.totalorder %v81, 1
    %vm84 = vcmp.ge.s32.totalorder %v82, 1
    %v85 = vpack.c.bf16 %v55, %v54
    %v86 = vrot.slane %v54, 7
    %v87 = vrot.slane %v55, 7
    %vm88 = vcmp.lt.s32.totalorder %v57, 1
    %v89 = vsel %vm88, %v86, %v87
    %v90 = vsel %vm88, %v87, %v86
    %v91 = vsel %vm83, 1, 0
    %v92 = vsel %vm84, 1, 0
    %vm93 = vcmp.eq.s32.totalorder %v91, 1
    %vm94 = vcmp.eq.s32.totalorder %v92, 1
    %v95 = vsel %vm93, %v90, 0.0
    %v96 = vsel %vm94, %v89, 0.0
    %v97 = vpack.c.bf16 %v96, %v95
    %v98 = vld [vmem:[#allocation3] sm:$0xf]
    %v99 = vld [vmem:[#allocation3 + $0x8] sm:$0xf]
    %v100 = vld [vmem:[#allocation3 + $0x10] sm:$0xf]
    %v101 = vld [vmem:[#allocation3 + $0x18] sm:$0xf]
    %v102 = vld [vmem:[#allocation3 + $0x20] sm:$0xf]
    %v103 = vld [vmem:[#allocation3 + $0x28] sm:$0xf]
    %v104 = vld [vmem:[#allocation3 + $0x30] sm:$0xf]
    %v105 = vld [vmem:[#allocation3 + $0x38] sm:$0xf]
    %v106 = vld [vmem:[#allocation3 + $0x40] sm:$0xf]
    %v107 = vld [vmem:[#allocation3 + $0x48] sm:$0xf]
    %v108 = vld [vmem:[#allocation3 + $0x50] sm:$0xf]
    %v109 = vld [vmem:[#allocation3 + $0x58] sm:$0xf]
    %v110 = vld [vmem:[#allocation3 + $0x60] sm:$0xf]
    %v111 = vld [vmem:[#allocation3 + $0x68] sm:$0xf]
    %v112 = vld [vmem:[#allocation3 + $0x70] sm:$0xf]
    %v113 = vld [vmem:[#allocation3 + $0x78] sm:$0xf]
    %s114 = scalar_lea.vmem [#allocation3], 256
    %v115 = vld [vmem:[%s114] sm:$0xf]
    %v116 = vld [vmem:[%s114 + $0x8] sm:$0xf]
    %v117 = vld [vmem:[%s114 + $0x10] sm:$0xf]
    %v118 = vld [vmem:[%s114 + $0x18] sm:$0xf]
    %v119 = vld [vmem:[%s114 + $0x20] sm:$0xf]
    %v120 = vld [vmem:[%s114 + $0x28] sm:$0xf]
    %v121 = vld [vmem:[%s114 + $0x30] sm:$0xf]
    %v122 = vld [vmem:[%s114 + $0x38] sm:$0xf]
    %v123 = vld [vmem:[%s114 + $0x40] sm:$0xf]
    %v124 = vld [vmem:[%s114 + $0x48] sm:$0xf]
    %v125 = vld [vmem:[%s114 + $0x50] sm:$0xf]
    %v126 = vld [vmem:[%s114 + $0x58] sm:$0xf]
    %v127 = vld [vmem:[%s114 + $0x60] sm:$0xf]
    %v128 = vld [vmem:[%s114 + $0x68] sm:$0xf]
    %v129 = vld [vmem:[%s114 + $0x70] sm:$0xf]
    %v130 = vld [vmem:[%s114 + $0x78] sm:$0xf]
    %v147 = vunpack.c.l.b16 %v115
    %v148 = vunpack.c.l.b16 %v116
    %v149 = vunpack.c.l.b16 %v117
    %v150 = vunpack.c.l.b16 %v118
    %v151 = vunpack.c.l.b16 %v119
    %v152 = vunpack.c.l.b16 %v120
    %v153 = vunpack.c.l.b16 %v121
    %v154 = vunpack.c.l.b16 %v122
    %v155 = vunpack.c.l.b16 %v123
    %v156 = vunpack.c.l.b16 %v124
    %v157 = vunpack.c.l.b16 %v125
    %v158 = vunpack.c.l.b16 %v126
    %v159 = vunpack.c.l.b16 %v127
    %v160 = vunpack.c.l.b16 %v128
    %v161 = vunpack.c.l.b16 %v129
    %v162 = vunpack.c.l.b16 %v130
    %v163 = vpack.c.b16 %v148, %v147
    %v164 = vpack.c.b16 %v150, %v149
    %v165 = vpack.c.b16 %v152, %v151
    %v166 = vpack.c.b16 %v154, %v153
    %v167 = vpack.c.b16 %v156, %v155
    %v168 = vpack.c.b16 %v158, %v157
    %v169 = vpack.c.b16 %v160, %v159
    %v170 = vpack.c.b16 %v162, %v161
    %179 = vmatpush.bf16.msra.mxu0 %v170
    %180 = vmatpush.bf16.msra.mxu0 %v169
    %181 = vmatpush.bf16.msra.mxu0 %v168
    %182 = vmatpush.bf16.msra.mxu0 %v167
    %183 = vmatpush.bf16.msra.mxu0 %v166
    %184 = vmatpush.bf16.msra.mxu0 %v165
    %185 = vmatpush.bf16.msra.mxu0 %v164
    %186 = vmatpush.bf16.msra.mxu0 %v163
    %187 = vmatmul.bf16.gmra.mxu0 %v85
    %v188 = vpop.f32.mrf.mxu0
    %v189 = vadd.f32 0.0, %v188
    %v190 = vpop.f32.mrf.mxu0
    %v191 = vadd.f32 0.0, %v190
    %192 = vdwg.mxu0
    %v209 = vunpack.c.l.b16 %v98
    %v210 = vunpack.c.l.b16 %v99
    %v211 = vunpack.c.l.b16 %v100
    %v212 = vunpack.c.l.b16 %v101
    %v213 = vunpack.c.l.b16 %v102
    %v214 = vunpack.c.l.b16 %v103
    %v215 = vunpack.c.l.b16 %v104
    %v216 = vunpack.c.l.b16 %v105
    %v217 = vunpack.c.l.b16 %v106
    %v218 = vunpack.c.l.b16 %v107
    %v219 = vunpack.c.l.b16 %v108
    %v220 = vunpack.c.l.b16 %v109
    %v221 = vunpack.c.l.b16 %v110
    %v222 = vunpack.c.l.b16 %v111
    %v223 = vunpack.c.l.b16 %v112
    %v224 = vunpack.c.l.b16 %v113
    %v225 = vpack.c.b16 %v210, %v209
    %v226 = vpack.c.b16 %v212, %v211
    %v227 = vpack.c.b16 %v214, %v213
    %v228 = vpack.c.b16 %v216, %v215
    %v229 = vpack.c.b16 %v218, %v217
    %v230 = vpack.c.b16 %v220, %v219
    %v231 = vpack.c.b16 %v222, %v221
    %v232 = vpack.c.b16 %v224, %v223
    %241 = vmatpush.bf16.msra.mxu0 %v232
    %242 = vmatpush.bf16.msra.mxu0 %v231
    %243 = vmatpush.bf16.msra.mxu0 %v230
    %244 = vmatpush.bf16.msra.mxu0 %v229
    %245 = vmatpush.bf16.msra.mxu0 %v228
    %246 = vmatpush.bf16.msra.mxu0 %v227
    %247 = vmatpush.bf16.msra.mxu0 %v226
    %248 = vmatpush.bf16.msra.mxu0 %v225
    %249 = vmatmul.bf16.gmra.mxu0 %v97
    %v250 = vpop.f32.mrf.mxu0
    %v251 = vadd.f32 %v189, %v250
    %v252 = vpop.f32.mrf.mxu0
    %v253 = vadd.f32 %v191, %v252
    %254 = vdwg.mxu0
    %v255 = vperm.slane %v45, 0
    %v256 = vadd.f32 %v251, %v255
    %v257 = vadd.f32 %v253, %v255
    %v258 = vmax.f32 %v256, 0.0
    %v259 = vmax.f32 %v257, 0.0
    %v260 = vpack.c.bf16 %v259, %v258
    %v261 = vrot.slane %v258, 7
    %v262 = vrot.slane %v259, 7
    %v263 = vsel %vm88, %v261, %v262
    %v264 = vsel %vm88, %v262, %v261
    %v265 = vsel %vm93, %v264, 0.0
    %v266 = vsel %vm94, %v263, 0.0
    %v267 = vpack.c.bf16 %v266, %v265
    %s268 = scalar_lea.vmem [#allocation3], 512
    %v269 = vld [vmem:[%s268] sm:$0xf]
    %v270 = vld [vmem:[%s268 + $0x8] sm:$0xf]
    %v271 = vld [vmem:[%s268 + $0x10] sm:$0xf]
    %v272 = vld [vmem:[%s268 + $0x18] sm:$0xf]
    %v273 = vld [vmem:[%s268 + $0x20] sm:$0xf]
    %v274 = vld [vmem:[%s268 + $0x28] sm:$0xf]
    %v275 = vld [vmem:[%s268 + $0x30] sm:$0xf]
    %v276 = vld [vmem:[%s268 + $0x38] sm:$0xf]
    %v277 = vld [vmem:[%s268 + $0x40] sm:$0xf]
    %v278 = vld [vmem:[%s268 + $0x48] sm:$0xf]
    %v279 = vld [vmem:[%s268 + $0x50] sm:$0xf]
    %v280 = vld [vmem:[%s268 + $0x58] sm:$0xf]
    %v281 = vld [vmem:[%s268 + $0x60] sm:$0xf]
    %v282 = vld [vmem:[%s268 + $0x68] sm:$0xf]
    %v283 = vld [vmem:[%s268 + $0x70] sm:$0xf]
    %v284 = vld [vmem:[%s268 + $0x78] sm:$0xf]
    %s285 = scalar_lea.vmem [#allocation3], 768
    %v286 = vld [vmem:[%s285] sm:$0xf]
    %v287 = vld [vmem:[%s285 + $0x8] sm:$0xf]
    %v288 = vld [vmem:[%s285 + $0x10] sm:$0xf]
    %v289 = vld [vmem:[%s285 + $0x18] sm:$0xf]
    %v290 = vld [vmem:[%s285 + $0x20] sm:$0xf]
    %v291 = vld [vmem:[%s285 + $0x28] sm:$0xf]
    %v292 = vld [vmem:[%s285 + $0x30] sm:$0xf]
    %v293 = vld [vmem:[%s285 + $0x38] sm:$0xf]
    %v294 = vld [vmem:[%s285 + $0x40] sm:$0xf]
    %v295 = vld [vmem:[%s285 + $0x48] sm:$0xf]
    %v296 = vld [vmem:[%s285 + $0x50] sm:$0xf]
    %v297 = vld [vmem:[%s285 + $0x58] sm:$0xf]
    %v298 = vld [vmem:[%s285 + $0x60] sm:$0xf]
    %v299 = vld [vmem:[%s285 + $0x68] sm:$0xf]
    %v300 = vld [vmem:[%s285 + $0x70] sm:$0xf]
    %v301 = vld [vmem:[%s285 + $0x78] sm:$0xf]
    %v318 = vunpack.c.l.b16 %v286
    %v319 = vunpack.c.l.b16 %v287
    %v320 = vunpack.c.l.b16 %v288
    %v321 = vunpack.c.l.b16 %v289
    %v322 = vunpack.c.l.b16 %v290
    %v323 = vunpack.c.l.b16 %v291
    %v324 = vunpack.c.l.b16 %v292
    %v325 = vunpack.c.l.b16 %v293
    %v326 = vunpack.c.l.b16 %v294
    %v327 = vunpack.c.l.b16 %v295
    %v328 = vunpack.c.l.b16 %v296
    %v329 = vunpack.c.l.b16 %v297
    %v330 = vunpack.c.l.b16 %v298
    %v331 = vunpack.c.l.b16 %v299
    %v332 = vunpack.c.l.b16 %v300
    %v333 = vunpack.c.l.b16 %v301
    %v334 = vpack.c.b16 %v319, %v318
    %v335 = vpack.c.b16 %v321, %v320
    %v336 = vpack.c.b16 %v323, %v322
    %v337 = vpack.c.b16 %v325, %v324
    %v338 = vpack.c.b16 %v327, %v326
    %v339 = vpack.c.b16 %v329, %v328
    %v340 = vpack.c.b16 %v331, %v330
    %v341 = vpack.c.b16 %v333, %v332
    %350 = vmatpush.bf16.msra.mxu0 %v341
    %351 = vmatpush.bf16.msra.mxu0 %v340
    %352 = vmatpush.bf16.msra.mxu0 %v339
    %353 = vmatpush.bf16.msra.mxu0 %v338
    %354 = vmatpush.bf16.msra.mxu0 %v337
    %355 = vmatpush.bf16.msra.mxu0 %v336
    %356 = vmatpush.bf16.msra.mxu0 %v335
    %357 = vmatpush.bf16.msra.mxu0 %v334
    %358 = vmatmul.bf16.gmra.mxu0 %v260
    %v359 = vpop.f32.mrf.mxu0
    %v360 = vadd.f32 0.0, %v359
    %v361 = vpop.f32.mrf.mxu0
    %v362 = vadd.f32 0.0, %v361
    %363 = vdwg.mxu0
    %v380 = vunpack.c.l.b16 %v269
    %v381 = vunpack.c.l.b16 %v270
    %v382 = vunpack.c.l.b16 %v271
    %v383 = vunpack.c.l.b16 %v272
    %v384 = vunpack.c.l.b16 %v273
    %v385 = vunpack.c.l.b16 %v274
    %v386 = vunpack.c.l.b16 %v275
    %v387 = vunpack.c.l.b16 %v276
    %v388 = vunpack.c.l.b16 %v277
    %v389 = vunpack.c.l.b16 %v278
    %v390 = vunpack.c.l.b16 %v279
    %v391 = vunpack.c.l.b16 %v280
    %v392 = vunpack.c.l.b16 %v281
    %v393 = vunpack.c.l.b16 %v282
    %v394 = vunpack.c.l.b16 %v283
    %v395 = vunpack.c.l.b16 %v284
    %v396 = vpack.c.b16 %v381, %v380
    %v397 = vpack.c.b16 %v383, %v382
    %v398 = vpack.c.b16 %v385, %v384
    %v399 = vpack.c.b16 %v387, %v386
    %v400 = vpack.c.b16 %v389, %v388
    %v401 = vpack.c.b16 %v391, %v390
    %v402 = vpack.c.b16 %v393, %v392
    %v403 = vpack.c.b16 %v395, %v394
    %412 = vmatpush.bf16.msra.mxu0 %v403
    %413 = vmatpush.bf16.msra.mxu0 %v402
    %414 = vmatpush.bf16.msra.mxu0 %v401
    %415 = vmatpush.bf16.msra.mxu0 %v400
    %416 = vmatpush.bf16.msra.mxu0 %v399
    %417 = vmatpush.bf16.msra.mxu0 %v398
    %418 = vmatpush.bf16.msra.mxu0 %v397
    %419 = vmatpush.bf16.msra.mxu0 %v396
    %420 = vmatmul.bf16.gmra.mxu0 %v267
    %v421 = vpop.f32.mrf.mxu0
    %v422 = vadd.f32 %v360, %v421
    %v423 = vpop.f32.mrf.mxu0
    %v424 = vadd.f32 %v362, %v423
    %425 = vdwg.mxu0
    %v426 = vperm.slane %v45, 1
    %v427 = vadd.f32 %v422, %v426
    %v428 = vadd.f32 %v424, %v426
    %v429 = vmax.f32 %v427, 0.0
    %v430 = vmax.f32 %v428, 0.0
    %v431 = vadd.f32 %v429, %v54
    %v432 = vadd.f32 %v430, %v55
    %v433 = vmax.f32 %v431, 0.0
    %v434 = vmax.f32 %v432, 0.0
    %vm435 = vcmp.ge.s32.totalorder %v81, 2
    %vm436 = vcmp.ge.s32.totalorder %v82, 2
    %v437 = vpack.c.bf16 %v434, %v433
    %v438 = vrot.slane %v433, 6
    %v439 = vrot.slane %v434, 6
    %vm440 = vcmp.lt.s32.totalorder %v57, 2
    %v441 = vsel %vm440, %v438, %v439
    %v442 = vsel %vm440, %v439, %v438
    %v443 = vsel %vm435, 1, 0
    %v444 = vsel %vm436, 1, 0
    %vm445 = vcmp.eq.s32.totalorder %v443, 1
    %vm446 = vcmp.eq.s32.totalorder %v444, 1
    %v447 = vsel %vm445, %v442, 0.0
    %v448 = vsel %vm446, %v441, 0.0
    %v449 = vpack.c.bf16 %v448, %v447
    %s450 = scalar_lea.vmem [#allocation3], 1024
    %v451 = vld [vmem:[%s450] sm:$0xff]
    %v452 = vld [vmem:[%s450 + $0x8] sm:$0xff]
    %v453 = vld [vmem:[%s450 + $0x10] sm:$0xff]
    %v454 = vld [vmem:[%s450 + $0x18] sm:$0xff]
    %v455 = vld [vmem:[%s450 + $0x20] sm:$0xff]
    %v456 = vld [vmem:[%s450 + $0x28] sm:$0xff]
    %v457 = vld [vmem:[%s450 + $0x30] sm:$0xff]
    %v458 = vld [vmem:[%s450 + $0x38] sm:$0xff]
    %v459 = vld [vmem:[%s450 + $0x40] sm:$0xff]
    %v460 = vld [vmem:[%s450 + $0x48] sm:$0xff]
    %v461 = vld [vmem:[%s450 + $0x50] sm:$0xff]
    %v462 = vld [vmem:[%s450 + $0x58] sm:$0xff]
    %v463 = vld [vmem:[%s450 + $0x60] sm:$0xff]
    %v464 = vld [vmem:[%s450 + $0x68] sm:$0xff]
    %v465 = vld [vmem:[%s450 + $0x70] sm:$0xff]
    %v466 = vld [vmem:[%s450 + $0x78] sm:$0xff]
    %s467 = scalar_lea.vmem [#allocation3], 1280
    %v468 = vld [vmem:[%s467] sm:$0xff]
    %v469 = vld [vmem:[%s467 + $0x8] sm:$0xff]
    %v470 = vld [vmem:[%s467 + $0x10] sm:$0xff]
    %v471 = vld [vmem:[%s467 + $0x18] sm:$0xff]
    %v472 = vld [vmem:[%s467 + $0x20] sm:$0xff]
    %v473 = vld [vmem:[%s467 + $0x28] sm:$0xff]
    %v474 = vld [vmem:[%s467 + $0x30] sm:$0xff]
    %v475 = vld [vmem:[%s467 + $0x38] sm:$0xff]
    %v476 = vld [vmem:[%s467 + $0x40] sm:$0xff]
    %v477 = vld [vmem:[%s467 + $0x48] sm:$0xff]
    %v478 = vld [vmem:[%s467 + $0x50] sm:$0xff]
    %v479 = vld [vmem:[%s467 + $0x58] sm:$0xff]
    %v480 = vld [vmem:[%s467 + $0x60] sm:$0xff]
    %v481 = vld [vmem:[%s467 + $0x68] sm:$0xff]
    %v482 = vld [vmem:[%s467 + $0x70] sm:$0xff]
    %v483 = vld [vmem:[%s467 + $0x78] sm:$0xff]
    %v500 = vunpack.c.l.b16 %v468
    %v501 = vunpack.c.h.b16 %v468
    %v502 = vunpack.c.l.b16 %v469
    %v503 = vunpack.c.h.b16 %v469
    %v504 = vunpack.c.l.b16 %v470
    %v505 = vunpack.c.h.b16 %v470
    %v506 = vunpack.c.l.b16 %v471
    %v507 = vunpack.c.h.b16 %v471
    %v508 = vunpack.c.l.b16 %v472
    %v509 = vunpack.c.h.b16 %v472
    %v510 = vunpack.c.l.b16 %v473
    %v511 = vunpack.c.h.b16 %v473
    %v512 = vunpack.c.l.b16 %v474
    %v513 = vunpack.c.h.b16 %v474
    %v514 = vunpack.c.l.b16 %v475
    %v515 = vunpack.c.h.b16 %v475
    %v516 = vunpack.c.l.b16 %v476
    %v517 = vunpack.c.h.b16 %v476
    %v518 = vunpack.c.l.b16 %v477
    %v519 = vunpack.c.h.b16 %v477
    %v520 = vunpack.c.l.b16 %v478
    %v521 = vunpack.c.h.b16 %v478
    %v522 = vunpack.c.l.b16 %v479
    %v523 = vunpack.c.h.b16 %v479
    %v524 = vunpack.c.l.b16 %v480
    %v525 = vunpack.c.h.b16 %v480
    %v526 = vunpack.c.l.b16 %v481
    %v527 = vunpack.c.h.b16 %v481
    %v528 = vunpack.c.l.b16 %v482
    %v529 = vunpack.c.h.b16 %v482
    %v530 = vunpack.c.l.b16 %v483
    %v531 = vunpack.c.h.b16 %v483
    %v532 = vpack.c.b16 %v502, %v500
    %v533 = vpack.c.b16 %v503, %v501
    %v534 = vpack.c.b16 %v506, %v504
    %v535 = vpack.c.b16 %v507, %v505
    %v536 = vpack.c.b16 %v510, %v508
    %v537 = vpack.c.b16 %v511, %v509
    %v538 = vpack.c.b16 %v514, %v512
    %v539 = vpack.c.b16 %v515, %v513
    %v540 = vpack.c.b16 %v518, %v516
    %v541 = vpack.c.b16 %v519, %v517
    %v542 = vpack.c.b16 %v522, %v520
    %v543 = vpack.c.b16 %v523, %v521
    %v544 = vpack.c.b16 %v526, %v524
    %v545 = vpack.c.b16 %v527, %v525
    %v546 = vpack.c.b16 %v530, %v528
    %v547 = vpack.c.b16 %v531, %v529
    %564 = vmatpush.bf16.msra.mxu0 %v546
    %565 = vmatpush.bf16.msra.mxu0 %v544
    %566 = vmatpush.bf16.msra.mxu0 %v542
    %567 = vmatpush.bf16.msra.mxu0 %v540
    %568 = vmatpush.bf16.msra.mxu0 %v538
    %569 = vmatpush.bf16.msra.mxu0 %v536
    %570 = vmatpush.bf16.msra.mxu0 %v534
    %571 = vmatpush.bf16.msra.mxu0 %v532
    %572 = vmatmul.bf16.gmra.mxu0 %v437
    %v573 = vpop.f32.mrf.mxu0
    %v574 = vadd.f32 0.0, %v573
    %v575 = vpop.f32.mrf.mxu0
    %v576 = vadd.f32 0.0, %v575
    %577 = vdwg.mxu0
    %578 = vmatpush.bf16.msra.mxu0 %v547
    %579 = vmatpush.bf16.msra.mxu0 %v545
    %580 = vmatpush.bf16.msra.mxu0 %v543
    %581 = vmatpush.bf16.msra.mxu0 %v541
    %582 = vmatpush.bf16.msra.mxu0 %v539
    %583 = vmatpush.bf16.msra.mxu0 %v537
    %584 = vmatpush.bf16.msra.mxu0 %v535
    %585 = vmatpush.bf16.msra.mxu0 %v533
    %586 = vmatmul.bf16.gmra.mxu0 %v437
    %v587 = vpop.f32.mrf.mxu0
    %v588 = vadd.f32 0.0, %v587
    %v589 = vpop.f32.mrf.mxu0
    %v590 = vadd.f32 0.0, %v589
    %591 = vdwg.mxu0
    %v608 = vunpack.c.l.b16 %v451
    %v609 = vunpack.c.h.b16 %v451
    %v610 = vunpack.c.l.b16 %v452
    %v611 = vunpack.c.h.b16 %v452
    %v612 = vunpack.c.l.b16 %v453
    %v613 = vunpack.c.h.b16 %v453
    %v614 = vunpack.c.l.b16 %v454
    %v615 = vunpack.c.h.b16 %v454
    %v616 = vunpack.c.l.b16 %v455
    %v617 = vunpack.c.h.b16 %v455
    %v618 = vunpack.c.l.b16 %v456
    %v619 = vunpack.c.h.b16 %v456
    %v620 = vunpack.c.l.b16 %v457
    %v621 = vunpack.c.h.b16 %v457
    %v622 = vunpack.c.l.b16 %v458
    %v623 = vunpack.c.h.b16 %v458
    %v624 = vunpack.c.l.b16 %v459
    %v625 = vunpack.c.h.b16 %v459
    %v626 = vunpack.c.l.b16 %v460
    %v627 = vunpack.c.h.b16 %v460
    %v628 = vunpack.c.l.b16 %v461
    %v629 = vunpack.c.h.b16 %v461
    %v630 = vunpack.c.l.b16 %v462
    %v631 = vunpack.c.h.b16 %v462
    %v632 = vunpack.c.l.b16 %v463
    %v633 = vunpack.c.h.b16 %v463
    %v634 = vunpack.c.l.b16 %v464
    %v635 = vunpack.c.h.b16 %v464
    %v636 = vunpack.c.l.b16 %v465
    %v637 = vunpack.c.h.b16 %v465
    %v638 = vunpack.c.l.b16 %v466
    %v639 = vunpack.c.h.b16 %v466
    %v640 = vpack.c.b16 %v610, %v608
    %v641 = vpack.c.b16 %v611, %v609
    %v642 = vpack.c.b16 %v614, %v612
    %v643 = vpack.c.b16 %v615, %v613
    %v644 = vpack.c.b16 %v618, %v616
    %v645 = vpack.c.b16 %v619, %v617
    %v646 = vpack.c.b16 %v622, %v620
    %v647 = vpack.c.b16 %v623, %v621
    %v648 = vpack.c.b16 %v626, %v624
    %v649 = vpack.c.b16 %v627, %v625
    %v650 = vpack.c.b16 %v630, %v628
    %v651 = vpack.c.b16 %v631, %v629
    %v652 = vpack.c.b16 %v634, %v632
    %v653 = vpack.c.b16 %v635, %v633
    %v654 = vpack.c.b16 %v638, %v636
    %v655 = vpack.c.b16 %v639, %v637
    %672 = vmatpush.bf16.msra.mxu0 %v654
    %673 = vmatpush.bf16.msra.mxu0 %v652
    %674 = vmatpush.bf16.msra.mxu0 %v650
    %675 = vmatpush.bf16.msra.mxu0 %v648
    %676 = vmatpush.bf16.msra.mxu0 %v646
    %677 = vmatpush.bf16.msra.mxu0 %v644
    %678 = vmatpush.bf16.msra.mxu0 %v642
    %679 = vmatpush.bf16.msra.mxu0 %v640
    %680 = vmatmul.bf16.gmra.mxu0 %v449
    %v681 = vpop.f32.mrf.mxu0
    %v682 = vadd.f32 %v574, %v681
    %v683 = vpop.f32.mrf.mxu0
    %v684 = vadd.f32 %v576, %v683
    %685 = vdwg.mxu0
    %686 = vmatpush.bf16.msra.mxu0 %v655
    %687 = vmatpush.bf16.msra.mxu0 %v653
    %688 = vmatpush.bf16.msra.mxu0 %v651
    %689 = vmatpush.bf16.msra.mxu0 %v649
    %690 = vmatpush.bf16.msra.mxu0 %v647
    %691 = vmatpush.bf16.msra.mxu0 %v645
    %692 = vmatpush.bf16.msra.mxu0 %v643
    %693 = vmatpush.bf16.msra.mxu0 %v641
    %694 = vmatmul.bf16.gmra.mxu0 %v449
    %v695 = vpop.f32.mrf.mxu0
    %v696 = vadd.f32 %v588, %v695
    %v697 = vpop.f32.mrf.mxu0
    %v698 = vadd.f32 %v590, %v697
    %699 = vdwg.mxu0
    %v700 = vperm.slane %v45, 2
    %v701 = vperm.slane %v46, 2
    %v702 = vadd.f32 %v682, %v700
    %v703 = vadd.f32 %v696, %v701
    %v704 = vadd.f32 %v684, %v700
    %v705 = vadd.f32 %v698, %v701
    %v706 = vmax.f32 %v702, 0.0
    %v707 = vmax.f32 %v703, 0.0
    %v708 = vmax.f32 %v704, 0.0
    %v709 = vmax.f32 %v705, 0.0
    %v710 = vpack.c.bf16 %v708, %v706
    %v711 = vpack.c.bf16 %v709, %v707
    %v712 = vrot.slane %v706, 6
    %v713 = vrot.slane %v707, 6
    %v714 = vrot.slane %v708, 6
    %v715 = vrot.slane %v709, 6
    %v716 = vsel %vm440, %v712, %v714
    %v717 = vsel %vm440, %v713, %v715
    %v718 = vsel %vm440, %v714, %v712
    %v719 = vsel %vm440, %v715, %v713
    %v720 = vsel %vm445, %v718, 0.0
    %v721 = vsel %vm445, %v719, 0.0
    %v722 = vsel %vm446, %v716, 0.0
    %v723 = vsel %vm446, %v717, 0.0
    %v724 = vpack.c.bf16 %v722, %v720
    %v725 = vpack.c.bf16 %v723, %v721
    %s726 = scalar_lea.vmem [#allocation3], 1536
    %v727 = vld [vmem:[%s726] sm:$0xff]
    %v728 = vld [vmem:[%s726 + $0x8] sm:$0xff]
    %v729 = vld [vmem:[%s726 + $0x10] sm:$0xff]
    %v730 = vld [vmem:[%s726 + $0x18] sm:$0xff]
    %v731 = vld [vmem:[%s726 + $0x20] sm:$0xff]
    %v732 = vld [vmem:[%s726 + $0x28] sm:$0xff]
    %v733 = vld [vmem:[%s726 + $0x30] sm:$0xff]
    %v734 = vld [vmem:[%s726 + $0x38] sm:$0xff]
    %v735 = vld [vmem:[%s726 + $0x40] sm:$0xff]
    %v736 = vld [vmem:[%s726 + $0x48] sm:$0xff]
    %v737 = vld [vmem:[%s726 + $0x50] sm:$0xff]
    %v738 = vld [vmem:[%s726 + $0x58] sm:$0xff]
    %v739 = vld [vmem:[%s726 + $0x60] sm:$0xff]
    %v740 = vld [vmem:[%s726 + $0x68] sm:$0xff]
    %v741 = vld [vmem:[%s726 + $0x70] sm:$0xff]
    %v742 = vld [vmem:[%s726 + $0x78] sm:$0xff]
    %v743 = vld [vmem:[%s726 + $0x80] sm:$0xff]
    %v744 = vld [vmem:[%s726 + $0x88] sm:$0xff]
    %v745 = vld [vmem:[%s726 + $0x90] sm:$0xff]
    %v746 = vld [vmem:[%s726 + $0x98] sm:$0xff]
    %v747 = vld [vmem:[%s726 + $0xa0] sm:$0xff]
    %v748 = vld [vmem:[%s726 + $0xa8] sm:$0xff]
    %v749 = vld [vmem:[%s726 + $0xb0] sm:$0xff]
    %v750 = vld [vmem:[%s726 + $0xb8] sm:$0xff]
    %v751 = vld [vmem:[%s726 + $0xc0] sm:$0xff]
    %v752 = vld [vmem:[%s726 + $0xc8] sm:$0xff]
    %v753 = vld [vmem:[%s726 + $0xd0] sm:$0xff]
    %v754 = vld [vmem:[%s726 + $0xd8] sm:$0xff]
    %v755 = vld [vmem:[%s726 + $0xe0] sm:$0xff]
    %v756 = vld [vmem:[%s726 + $0xe8] sm:$0xff]
    %v757 = vld [vmem:[%s726 + $0xf0] sm:$0xff]
    %v758 = vld [vmem:[%s726 + $0xf8] sm:$0xff]
    %s759 = scalar_lea.vmem [#allocation3], 1792
    %v760 = vld [vmem:[%s759] sm:$0xff]
    %v761 = vld [vmem:[%s759 + $0x8] sm:$0xff]
    %v762 = vld [vmem:[%s759 + $0x10] sm:$0xff]
    %v763 = vld [vmem:[%s759 + $0x18] sm:$0xff]
    %v764 = vld [vmem:[%s759 + $0x20] sm:$0xff]
    %v765 = vld [vmem:[%s759 + $0x28] sm:$0xff]
    %v766 = vld [vmem:[%s759 + $0x30] sm:$0xff]
    %v767 = vld [vmem:[%s759 + $0x38] sm:$0xff]
    %v768 = vld [vmem:[%s759 + $0x40] sm:$0xff]
    %v769 = vld [vmem:[%s759 + $0x48] sm:$0xff]
    %v770 = vld [vmem:[%s759 + $0x50] sm:$0xff]
    %v771 = vld [vmem:[%s759 + $0x58] sm:$0xff]
    %v772 = vld [vmem:[%s759 + $0x60] sm:$0xff]
    %v773 = vld [vmem:[%s759 + $0x68] sm:$0xff]
    %v774 = vld [vmem:[%s759 + $0x70] sm:$0xff]
    %v775 = vld [vmem:[%s759 + $0x78] sm:$0xff]
    %v776 = vld [vmem:[%s759 + $0x80] sm:$0xff]
    %v777 = vld [vmem:[%s759 + $0x88] sm:$0xff]
    %v778 = vld [vmem:[%s759 + $0x90] sm:$0xff]
    %v779 = vld [vmem:[%s759 + $0x98] sm:$0xff]
    %v780 = vld [vmem:[%s759 + $0xa0] sm:$0xff]
    %v781 = vld [vmem:[%s759 + $0xa8] sm:$0xff]
    %v782 = vld [vmem:[%s759 + $0xb0] sm:$0xff]
    %v783 = vld [vmem:[%s759 + $0xb8] sm:$0xff]
    %v784 = vld [vmem:[%s759 + $0xc0] sm:$0xff]
    %v785 = vld [vmem:[%s759 + $0xc8] sm:$0xff]
    %v786 = vld [vmem:[%s759 + $0xd0] sm:$0xff]
    %v787 = vld [vmem:[%s759 + $0xd8] sm:$0xff]
    %v788 = vld [vmem:[%s759 + $0xe0] sm:$0xff]
    %v789 = vld [vmem:[%s759 + $0xe8] sm:$0xff]
    %v790 = vld [vmem:[%s759 + $0xf0] sm:$0xff]
    %v791 = vld [vmem:[%s759 + $0xf8] sm:$0xff]
    %v824 = vunpack.c.l.b16 %v760
    %v825 = vunpack.c.h.b16 %v760
    %v826 = vunpack.c.l.b16 %v761
    %v827 = vunpack.c.h.b16 %v761
    %v828 = vunpack.c.l.b16 %v762
    %v829 = vunpack.c.h.b16 %v762
    %v830 = vunpack.c.l.b16 %v763
    %v831 = vunpack.c.h.b16 %v763
    %v832 = vunpack.c.l.b16 %v764
    %v833 = vunpack.c.h.b16 %v764
    %v834 = vunpack.c.l.b16 %v765
    %v835 = vunpack.c.h.b16 %v765
    %v836 = vunpack.c.l.b16 %v766
    %v837 = vunpack.c.h.b16 %v766
    %v838 = vunpack.c.l.b16 %v767
    %v839 = vunpack.c.h.b16 %v767
    %v840 = vunpack.c.l.b16 %v768
    %v841 = vunpack.c.h.b16 %v768
    %v842 = vunpack.c.l.b16 %v769
    %v843 = vunpack.c.h.b16 %v769
    %v844 = vunpack.c.l.b16 %v770
    %v845 = vunpack.c.h.b16 %v770
    %v846 = vunpack.c.l.b16 %v771
    %v847 = vunpack.c.h.b16 %v771
    %v848 = vunpack.c.l.b16 %v772
    %v849 = vunpack.c.h.b16 %v772
    %v850 = vunpack.c.l.b16 %v773
    %v851 = vunpack.c.h.b16 %v773
    %v852 = vunpack.c.l.b16 %v774
    %v853 = vunpack.c.h.b16 %v774
    %v854 = vunpack.c.l.b16 %v775
    %v855 = vunpack.c.h.b16 %v775
    %v856 = vunpack.c.l.b16 %v776
    %v857 = vunpack.c.h.b16 %v776
    %v858 = vunpack.c.l.b16 %v777
    %v859 = vunpack.c.h.b16 %v777
    %v860 = vunpack.c.l.b16 %v778
    %v861 = vunpack.c.h.b16 %v778
    %v862 = vunpack.c.l.b16 %v779
    %v863 = vunpack.c.h.b16 %v779
    %v864 = vunpack.c.l.b16 %v780
    %v865 = vunpack.c.h.b16 %v780
    %v866 = vunpack.c.l.b16 %v781
    %v867 = vunpack.c.h.b16 %v781
    %v868 = vunpack.c.l.b16 %v782
    %v869 = vunpack.c.h.b16 %v782
    %v870 = vunpack.c.l.b16 %v783
    %v871 = vunpack.c.h.b16 %v783
    %v872 = vunpack.c.l.b16 %v784
    %v873 = vunpack.c.h.b16 %v784
    %v874 = vunpack.c.l.b16 %v785
    %v875 = vunpack.c.h.b16 %v785
    %v876 = vunpack.c.l.b16 %v786
    %v877 = vunpack.c.h.b16 %v786
    %v878 = vunpack.c.l.b16 %v787
    %v879 = vunpack.c.h.b16 %v787
    %v880 = vunpack.c.l.b16 %v788
    %v881 = vunpack.c.h.b16 %v788
    %v882 = vunpack.c.l.b16 %v789
    %v883 = vunpack.c.h.b16 %v789
    %v884 = vunpack.c.l.b16 %v790
    %v885 = vunpack.c.h.b16 %v790
    %v886 = vunpack.c.l.b16 %v791
    %v887 = vunpack.c.h.b16 %v791
    %v888 = vpack.c.b16 %v826, %v824
    %v889 = vpack.c.b16 %v827, %v825
    %v890 = vpack.c.b16 %v830, %v828
    %v891 = vpack.c.b16 %v831, %v829
    %v892 = vpack.c.b16 %v834, %v832
    %v893 = vpack.c.b16 %v835, %v833
    %v894 = vpack.c.b16 %v838, %v836
    %v895 = vpack.c.b16 %v839, %v837
    %v896 = vpack.c.b16 %v842, %v840
    %v897 = vpack.c.b16 %v843, %v841
    %v898 = vpack.c.b16 %v846, %v844
    %v899 = vpack.c.b16 %v847, %v845
    %v900 = vpack.c.b16 %v850, %v848
    %v901 = vpack.c.b16 %v851, %v849
    %v902 = vpack.c.b16 %v854, %v852
    %v903 = vpack.c.b16 %v855, %v853
    %v904 = vpack.c.b16 %v858, %v856
    %v905 = vpack.c.b16 %v859, %v857
    %v906 = vpack.c.b16 %v862, %v860
    %v907 = vpack.c.b16 %v863, %v861
    %v908 = vpack.c.b16 %v866, %v864
    %v909 = vpack.c.b16 %v867, %v865
    %v910 = vpack.c.b16 %v870, %v868
    %v911 = vpack.c.b16 %v871, %v869
    %v912 = vpack.c.b16 %v874, %v872
    %v913 = vpack.c.b16 %v875, %v873
    %v914 = vpack.c.b16 %v878, %v876
    %v915 = vpack.c.b16 %v879, %v877
    %v916 = vpack.c.b16 %v882, %v880
    %v917 = vpack.c.b16 %v883, %v881
    %v918 = vpack.c.b16 %v886, %v884
    %v919 = vpack.c.b16 %v887, %v885
    %952 = vmatpush.bf16.msra.mxu0 %v902
    %953 = vmatpush.bf16.msra.mxu0 %v900
    %954 = vmatpush.bf16.msra.mxu0 %v898
    %955 = vmatpush.bf16.msra.mxu0 %v896
    %956 = vmatpush.bf16.msra.mxu0 %v894
    %957 = vmatpush.bf16.msra.mxu0 %v892
    %958 = vmatpush.bf16.msra.mxu0 %v890
    %959 = vmatpush.bf16.msra.mxu0 %v888
    %960 = vmatmul.bf16.gmra.mxu0 %v710
    %v961 = vpop.f32.mrf.mxu0
    %v962 = vadd.f32 0.0, %v961
    %v963 = vpop.f32.mrf.mxu0
    %v964 = vadd.f32 0.0, %v963
    %965 = vdwg.mxu0
    %966 = vmatpush.bf16.msra.mxu0 %v918
    %967 = vmatpush.bf16.msra.mxu0 %v916
    %968 = vmatpush.bf16.msra.mxu0 %v914
    %969 = vmatpush.bf16.msra.mxu0 %v912
    %970 = vmatpush.bf16.msra.mxu0 %v910
    %971 = vmatpush.bf16.msra.mxu0 %v908
    %972 = vmatpush.bf16.msra.mxu0 %v906
    %973 = vmatpush.bf16.msra.mxu0 %v904
    %974 = vmatmul.bf16.gmra.mxu0 %v711
    %v975 = vpop.f32.mrf.mxu0
    %v976 = vadd.f32 %v962, %v975
    %v977 = vpop.f32.mrf.mxu0
    %v978 = vadd.f32 %v964, %v977
    %979 = vdwg.mxu0
    %980 = vmatpush.bf16.msra.mxu0 %v903
    %981 = vmatpush.bf16.msra.mxu0 %v901
    %982 = vmatpush.bf16.msra.mxu0 %v899
    %983 = vmatpush.bf16.msra.mxu0 %v897
    %984 = vmatpush.bf16.msra.mxu0 %v895
    %985 = vmatpush.bf16.msra.mxu0 %v893
    %986 = vmatpush.bf16.msra.mxu0 %v891
    %987 = vmatpush.bf16.msra.mxu0 %v889
    %988 = vmatmul.bf16.gmra.mxu0 %v710
    %v989 = vpop.f32.mrf.mxu0
    %v990 = vadd.f32 0.0, %v989
    %v991 = vpop.f32.mrf.mxu0
    %v992 = vadd.f32 0.0, %v991
    %993 = vdwg.mxu0
    %994 = vmatpush.bf16.msra.mxu0 %v919
    %995 = vmatpush.bf16.msra.mxu0 %v917
    %996 = vmatpush.bf16.msra.mxu0 %v915
    %997 = vmatpush.bf16.msra.mxu0 %v913
    %998 = vmatpush.bf16.msra.mxu0 %v911
    %999 = vmatpush.bf16.msra.mxu0 %v909
    %1000 = vmatpush.bf16.msra.mxu0 %v907
    %1001 = vmatpush.bf16.msra.mxu0 %v905
    %1002 = vmatmul.bf16.gmra.mxu0 %v711
    %v1003 = vpop.f32.mrf.mxu0
    %v1004 = vadd.f32 %v990, %v1003
    %v1005 = vpop.f32.mrf.mxu0
    %v1006 = vadd.f32 %v992, %v1005
    %1007 = vdwg.mxu0
    %v1040 = vunpack.c.l.b16 %v727
    %v1041 = vunpack.c.h.b16 %v727
    %v1042 = vunpack.c.l.b16 %v728
    %v1043 = vunpack.c.h.b16 %v728
    %v1044 = vunpack.c.l.b16 %v729
    %v1045 = vunpack.c.h.b16 %v729
    %v1046 = vunpack.c.l.b16 %v730
    %v1047 = vunpack.c.h.b16 %v730
    %v1048 = vunpack.c.l.b16 %v731
    %v1049 = vunpack.c.h.b16 %v731
    %v1050 = vunpack.c.l.b16 %v732
    %v1051 = vunpack.c.h.b16 %v732
    %v1052 = vunpack.c.l.b16 %v733
    %v1053 = vunpack.c.h.b16 %v733
    %v1054 = vunpack.c.l.b16 %v734
    %v1055 = vunpack.c.h.b16 %v734
    %v1056 = vunpack.c.l.b16 %v735
    %v1057 = vunpack.c.h.b16 %v735
    %v1058 = vunpack.c.l.b16 %v736
    %v1059 = vunpack.c.h.b16 %v736
    %v1060 = vunpack.c.l.b16 %v737
    %v1061 = vunpack.c.h.b16 %v737
    %v1062 = vunpack.c.l.b16 %v738
    %v1063 = vunpack.c.h.b16 %v738
    %v1064 = vunpack.c.l.b16 %v739
    %v1065 = vunpack.c.h.b16 %v739
    %v1066 = vunpack.c.l.b16 %v740
    %v1067 = vunpack.c.h.b16 %v740
    %v1068 = vunpack.c.l.b16 %v741
    %v1069 = vunpack.c.h.b16 %v741
    %v1070 = vunpack.c.l.b16 %v742
    %v1071 = vunpack.c.h.b16 %v742
    %v1072 = vunpack.c.l.b16 %v743
    %v1073 = vunpack.c.h.b16 %v743
    %v1074 = vunpack.c.l.b16 %v744
    %v1075 = vunpack.c.h.b16 %v744
    %v1076 = vunpack.c.l.b16 %v745
    %v1077 = vunpack.c.h.b16 %v745
    %v1078 = vunpack.c.l.b16 %v746
    %v1079 = vunpack.c.h.b16 %v746
    %v1080 = vunpack.c.l.b16 %v747
    %v1081 = vunpack.c.h.b16 %v747
    %v1082 = vunpack.c.l.b16 %v748
    %v1083 = vunpack.c.h.b16 %v748
    %v1084 = vunpack.c.l.b16 %v749
    %v1085 = vunpack.c.h.b16 %v749
    %v1086 = vunpack.c.l.b16 %v750
    %v1087 = vunpack.c.h.b16 %v750
    %v1088 = vunpack.c.l.b16 %v751
    %v1089 = vunpack.c.h.b16 %v751
    %v1090 = vunpack.c.l.b16 %v752
    %v1091 = vunpack.c.h.b16 %v752
    %v1092 = vunpack.c.l.b16 %v753
    %v1093 = vunpack.c.h.b16 %v753
    %v1094 = vunpack.c.l.b16 %v754
    %v1095 = vunpack.c.h.b16 %v754
    %v1096 = vunpack.c.l.b16 %v755
    %v1097 = vunpack.c.h.b16 %v755
    %v1098 = vunpack.c.l.b16 %v756
    %v1099 = vunpack.c.h.b16 %v756
    %v1100 = vunpack.c.l.b16 %v757
    %v1101 = vunpack.c.h.b16 %v757
    %v1102 = vunpack.c.l.b16 %v758
    %v1103 = vunpack.c.h.b16 %v758
    %v1104 = vpack.c.b16 %v1042, %v1040
    %v1105 = vpack.c.b16 %v1043, %v1041
    %v1106 = vpack.c.b16 %v1046, %v1044
    %v1107 = vpack.c.b16 %v1047, %v1045
    %v1108 = vpack.c.b16 %v1050, %v1048
    %v1109 = vpack.c.b16 %v1051, %v1049
    %v1110 = vpack.c.b16 %v1054, %v1052
    %v1111 = vpack.c.b16 %v1055, %v1053
    %v1112 = vpack.c.b16 %v1058, %v1056
    %v1113 = vpack.c.b16 %v1059, %v1057
    %v1114 = vpack.c.b16 %v1062, %v1060
    %v1115 = vpack.c.b16 %v1063, %v1061
    %v1116 = vpack.c.b16 %v1066, %v1064
    %v1117 = vpack.c.b16 %v1067, %v1065
    %v1118 = vpack.c.b16 %v1070, %v1068
    %v1119 = vpack.c.b16 %v1071, %v1069
    %v1120 = vpack.c.b16 %v1074, %v1072
    %v1121 = vpack.c.b16 %v1075, %v1073
    %v1122 = vpack.c.b16 %v1078, %v1076
    %v1123 = vpack.c.b16 %v1079, %v1077
    %v1124 = vpack.c.b16 %v1082, %v1080
    %v1125 = vpack.c.b16 %v1083, %v1081
    %v1126 = vpack.c.b16 %v1086, %v1084
    %v1127 = vpack.c.b16 %v1087, %v1085
    %v1128 = vpack.c.b16 %v1090, %v1088
    %v1129 = vpack.c.b16 %v1091, %v1089
    %v1130 = vpack.c.b16 %v1094, %v1092
    %v1131 = vpack.c.b16 %v1095, %v1093
    %v1132 = vpack.c.b16 %v1098, %v1096
    %v1133 = vpack.c.b16 %v1099, %v1097
    %v1134 = vpack.c.b16 %v1102, %v1100
    %v1135 = vpack.c.b16 %v1103, %v1101
    %1168 = vmatpush.bf16.msra.mxu0 %v1118
    %1169 = vmatpush.bf16.msra.mxu0 %v1116
    %1170 = vmatpush.bf16.msra.mxu0 %v1114
    %1171 = vmatpush.bf16.msra.mxu0 %v1112
    %1172 = vmatpush.bf16.msra.mxu0 %v1110
    %1173 = vmatpush.bf16.msra.mxu0 %v1108
    %1174 = vmatpush.bf16.msra.mxu0 %v1106
    %1175 = vmatpush.bf16.msra.mxu0 %v1104
    %1176 = vmatmul.bf16.gmra.mxu0 %v724
    %v1177 = vpop.f32.mrf.mxu0
    %v1178 = vadd.f32 %v976, %v1177
    %v1179 = vpop.f32.mrf.mxu0
    %v1180 = vadd.f32 %v978, %v1179
    %1181 = vdwg.mxu0
    %1182 = vmatpush.bf16.msra.mxu0 %v1134
    %1183 = vmatpush.bf16.msra.mxu0 %v1132
    %1184 = vmatpush.bf16.msra.mxu0 %v1130
    %1185 = vmatpush.bf16.msra.mxu0 %v1128
    %1186 = vmatpush.bf16.msra.mxu0 %v1126
    %1187 = vmatpush.bf16.msra.mxu0 %v1124
    %1188 = vmatpush.bf16.msra.mxu0 %v1122
    %1189 = vmatpush.bf16.msra.mxu0 %v1120
    %1190 = vmatmul.bf16.gmra.mxu0 %v725
    %v1191 = vpop.f32.mrf.mxu0
    %v1192 = vadd.f32 %v1178, %v1191
    %v1193 = vpop.f32.mrf.mxu0
    %v1194 = vadd.f32 %v1180, %v1193
    %1195 = vdwg.mxu0
    %1196 = vmatpush.bf16.msra.mxu0 %v1119
    %1197 = vmatpush.bf16.msra.mxu0 %v1117
    %1198 = vmatpush.bf16.msra.mxu0 %v1115
    %1199 = vmatpush.bf16.msra.mxu0 %v1113
    %1200 = vmatpush.bf16.msra.mxu0 %v1111
    %1201 = vmatpush.bf16.msra.mxu0 %v1109
    %1202 = vmatpush.bf16.msra.mxu0 %v1107
    %1203 = vmatpush.bf16.msra.mxu0 %v1105
    %1204 = vmatmul.bf16.gmra.mxu0 %v724
    %v1205 = vpop.f32.mrf.mxu0
    %v1206 = vadd.f32 %v1004, %v1205
    %v1207 = vpop.f32.mrf.mxu0
    %v1208 = vadd.f32 %v1006, %v1207
    %1209 = vdwg.mxu0
    %1210 = vmatpush.bf16.msra.mxu0 %v1135
    %1211 = vmatpush.bf16.msra.mxu0 %v1133
    %1212 = vmatpush.bf16.msra.mxu0 %v1131
    %1213 = vmatpush.bf16.msra.mxu0 %v1129
    %1214 = vmatpush.bf16.msra.mxu0 %v1127
    %1215 = vmatpush.bf16.msra.mxu0 %v1125
    %1216 = vmatpush.bf16.msra.mxu0 %v1123
    %1217 = vmatpush.bf16.msra.mxu0 %v1121
    %1218 = vmatmul.bf16.gmra.mxu0 %v725
    %v1219 = vpop.f32.mrf.mxu0
    %v1220 = vadd.f32 %v1206, %v1219
    %v1221 = vpop.f32.mrf.mxu0
    %v1222 = vadd.f32 %v1208, %v1221
    %1223 = vdwg.mxu0
    %v1224 = vperm.slane %v45, 3
    %v1225 = vperm.slane %v46, 3
    %v1226 = vadd.f32 %v1192, %v1224
    %v1227 = vadd.f32 %v1220, %v1225
    %v1228 = vadd.f32 %v1194, %v1224
    %v1229 = vadd.f32 %v1222, %v1225
    %v1230 = vmax.f32 %v1226, 0.0
    %v1231 = vmax.f32 %v1227, 0.0
    %v1232 = vmax.f32 %v1228, 0.0
    %v1233 = vmax.f32 %v1229, 0.0
    %s1234 = scalar_lea.vmem [#allocation3], 2048
    %v1235 = vld [vmem:[%s1234] sm:$0xff]
    %v1236 = vld [vmem:[%s1234 + $0x8] sm:$0xff]
    %v1237 = vld [vmem:[%s1234 + $0x10] sm:$0xff]
    %v1238 = vld [vmem:[%s1234 + $0x18] sm:$0xff]
    %v1239 = vld [vmem:[%s1234 + $0x20] sm:$0xff]
    %v1240 = vld [vmem:[%s1234 + $0x28] sm:$0xff]
    %v1241 = vld [vmem:[%s1234 + $0x30] sm:$0xff]
    %v1242 = vld [vmem:[%s1234 + $0x38] sm:$0xff]
    %v1243 = vld [vmem:[%s1234 + $0x40] sm:$0xff]
    %v1244 = vld [vmem:[%s1234 + $0x48] sm:$0xff]
    %v1245 = vld [vmem:[%s1234 + $0x50] sm:$0xff]
    %v1246 = vld [vmem:[%s1234 + $0x58] sm:$0xff]
    %v1247 = vld [vmem:[%s1234 + $0x60] sm:$0xff]
    %v1248 = vld [vmem:[%s1234 + $0x68] sm:$0xff]
    %v1249 = vld [vmem:[%s1234 + $0x70] sm:$0xff]
    %v1250 = vld [vmem:[%s1234 + $0x78] sm:$0xff]
    %v1251 = vperm.slane %v45, 4
    %v1252 = vperm.slane %v46, 4
    %v1269 = vunpack.c.l.b16 %v1235
    %v1270 = vunpack.c.h.b16 %v1235
    %v1271 = vunpack.c.l.b16 %v1236
    %v1272 = vunpack.c.h.b16 %v1236
    %v1273 = vunpack.c.l.b16 %v1237
    %v1274 = vunpack.c.h.b16 %v1237
    %v1275 = vunpack.c.l.b16 %v1238
    %v1276 = vunpack.c.h.b16 %v1238
    %v1277 = vunpack.c.l.b16 %v1239
    %v1278 = vunpack.c.h.b16 %v1239
    %v1279 = vunpack.c.l.b16 %v1240
    %v1280 = vunpack.c.h.b16 %v1240
    %v1281 = vunpack.c.l.b16 %v1241
    %v1282 = vunpack.c.h.b16 %v1241
    %v1283 = vunpack.c.l.b16 %v1242
    %v1284 = vunpack.c.h.b16 %v1242
    %v1285 = vunpack.c.l.b16 %v1243
    %v1286 = vunpack.c.h.b16 %v1243
    %v1287 = vunpack.c.l.b16 %v1244
    %v1288 = vunpack.c.h.b16 %v1244
    %v1289 = vunpack.c.l.b16 %v1245
    %v1290 = vunpack.c.h.b16 %v1245
    %v1291 = vunpack.c.l.b16 %v1246
    %v1292 = vunpack.c.h.b16 %v1246
    %v1293 = vunpack.c.l.b16 %v1247
    %v1294 = vunpack.c.h.b16 %v1247
    %v1295 = vunpack.c.l.b16 %v1248
    %v1296 = vunpack.c.h.b16 %v1248
    %v1297 = vunpack.c.l.b16 %v1249
    %v1298 = vunpack.c.h.b16 %v1249
    %v1299 = vunpack.c.l.b16 %v1250
    %v1300 = vunpack.c.h.b16 %v1250
    %v1301 = vpack.c.b16 %v1271, %v1269
    %v1302 = vpack.c.b16 %v1272, %v1270
    %v1303 = vpack.c.b16 %v1275, %v1273
    %v1304 = vpack.c.b16 %v1276, %v1274
    %v1305 = vpack.c.b16 %v1279, %v1277
    %v1306 = vpack.c.b16 %v1280, %v1278
    %v1307 = vpack.c.b16 %v1283, %v1281
    %v1308 = vpack.c.b16 %v1284, %v1282
    %v1309 = vpack.c.b16 %v1287, %v1285
    %v1310 = vpack.c.b16 %v1288, %v1286
    %v1311 = vpack.c.b16 %v1291, %v1289
    %v1312 = vpack.c.b16 %v1292, %v1290
    %v1313 = vpack.c.b16 %v1295, %v1293
    %v1314 = vpack.c.b16 %v1296, %v1294
    %v1315 = vpack.c.b16 %v1299, %v1297
    %v1316 = vpack.c.b16 %v1300, %v1298
    %1333 = vmatpush.bf16.msra.mxu0 %v1315
    %1334 = vmatpush.bf16.msra.mxu0 %v1313
    %1335 = vmatpush.bf16.msra.mxu0 %v1311
    %1336 = vmatpush.bf16.msra.mxu0 %v1309
    %1337 = vmatpush.bf16.msra.mxu0 %v1307
    %1338 = vmatpush.bf16.msra.mxu0 %v1305
    %1339 = vmatpush.bf16.msra.mxu0 %v1303
    %1340 = vmatpush.bf16.msra.mxu0 %v1301
    %1341 = vmatmul.bf16.gmra.mxu0 %v437
    %v1342 = vpop.f32.mrf.mxu0
    %v1343 = vadd.f32 %v1251, %v1342
    %v1344 = vpop.f32.mrf.mxu0
    %v1345 = vadd.f32 %v1251, %v1344
    %1346 = vdwg.mxu0
    %1347 = vmatpush.bf16.msra.mxu0 %v1316
    %1348 = vmatpush.bf16.msra.mxu0 %v1314
    %1349 = vmatpush.bf16.msra.mxu0 %v1312
    %1350 = vmatpush.bf16.msra.mxu0 %v1310
    %1351 = vmatpush.bf16.msra.mxu0 %v1308
    %1352 = vmatpush.bf16.msra.mxu0 %v1306
    %1353 = vmatpush.bf16.msra.mxu0 %v1304
    %1354 = vmatpush.bf16.msra.mxu0 %v1302
    %1355 = vmatmul.bf16.gmra.mxu0 %v437
    %v1356 = vpop.f32.mrf.mxu0
    %v1357 = vadd.f32 %v1252, %v1356
    %v1358 = vpop.f32.mrf.mxu0
    %v1359 = vadd.f32 %v1252, %v1358
    %1360 = vdwg.mxu0
    %v1361 = vadd.f32 %v1230, %v1343
    %v1362 = vadd.f32 %v1231, %v1357
    %v1363 = vadd.f32 %v1232, %v1345
    %v1364 = vadd.f32 %v1233, %v1359
    %v1365 = vmax.f32 %v1361, 0.0
    %v1366 = vmax.f32 %v1362, 0.0
    %v1367 = vmax.f32 %v1363, 0.0
    %v1368 = vmax.f32 %v1364, 0.0
    %vm1369 = vcmp.ge.s32.totalorder %v81, 4
    %vm1370 = vcmp.ge.s32.totalorder %v82, 4
    %v1371 = vpack.c.bf16 %v1367, %v1365
    %v1372 = vpack.c.bf16 %v1368, %v1366
    %v1373 = vrot.slane %v1365, 4
    %v1374 = vrot.slane %v1366, 4
    %v1375 = vrot.slane %v1367, 4
    %v1376 = vrot.slane %v1368, 4
    %vm1377 = vcmp.lt.s32.totalorder %v57, 4
    %v1378 = vsel %vm1377, %v1373, %v1375
    %v1379 = vsel %vm1377, %v1374, %v1376
    %v1380 = vsel %vm1377, %v1375, %v1373
    %v1381 = vsel %vm1377, %v1376, %v1374
    %v1382 = vsel %vm1369, 1, 0
    %v1383 = vsel %vm1370, 1, 0
    %vm1384 = vcmp.eq.s32.totalorder %v1382, 1
    %vm1385 = vcmp.eq.s32.totalorder %v1383, 1
    %v1386 = vsel %vm1384, %v1380, 0.0
    %v1387 = vsel %vm1384, %v1381, 0.0
    %v1388 = vsel %vm1385, %v1378, 0.0
    %v1389 = vsel %vm1385, %v1379, 0.0
    %v1390 = vpack.c.bf16 %v1388, %v1386
    %v1391 = vpack.c.bf16 %v1389, %v1387
    %s1392 = scalar_lea.vmem [#allocation3], 2304
    %v1393 = vld [vmem:[%s1392] sm:$0xf]
    %v1394 = vld [vmem:[%s1392 + $0x8] sm:$0xf]
    %v1395 = vld [vmem:[%s1392 + $0x10] sm:$0xf]
    %v1396 = vld [vmem:[%s1392 + $0x18] sm:$0xf]
    %v1397 = vld [vmem:[%s1392 + $0x20] sm:$0xf]
    %v1398 = vld [vmem:[%s1392 + $0x28] sm:$0xf]
    %v1399 = vld [vmem:[%s1392 + $0x30] sm:$0xf]
    %v1400 = vld [vmem:[%s1392 + $0x38] sm:$0xf]
    %v1401 = vld [vmem:[%s1392 + $0x40] sm:$0xf]
    %v1402 = vld [vmem:[%s1392 + $0x48] sm:$0xf]
    %v1403 = vld [vmem:[%s1392 + $0x50] sm:$0xf]
    %v1404 = vld [vmem:[%s1392 + $0x58] sm:$0xf]
    %v1405 = vld [vmem:[%s1392 + $0x60] sm:$0xf]
    %v1406 = vld [vmem:[%s1392 + $0x68] sm:$0xf]
    %v1407 = vld [vmem:[%s1392 + $0x70] sm:$0xf]
    %v1408 = vld [vmem:[%s1392 + $0x78] sm:$0xf]
    %v1409 = vld [vmem:[%s1392 + $0x80] sm:$0xf]
    %v1410 = vld [vmem:[%s1392 + $0x88] sm:$0xf]
    %v1411 = vld [vmem:[%s1392 + $0x90] sm:$0xf]
    %v1412 = vld [vmem:[%s1392 + $0x98] sm:$0xf]
    %v1413 = vld [vmem:[%s1392 + $0xa0] sm:$0xf]
    %v1414 = vld [vmem:[%s1392 + $0xa8] sm:$0xf]
    %v1415 = vld [vmem:[%s1392 + $0xb0] sm:$0xf]
    %v1416 = vld [vmem:[%s1392 + $0xb8] sm:$0xf]
    %v1417 = vld [vmem:[%s1392 + $0xc0] sm:$0xf]
    %v1418 = vld [vmem:[%s1392 + $0xc8] sm:$0xf]
    %v1419 = vld [vmem:[%s1392 + $0xd0] sm:$0xf]
    %v1420 = vld [vmem:[%s1392 + $0xd8] sm:$0xf]
    %v1421 = vld [vmem:[%s1392 + $0xe0] sm:$0xf]
    %v1422 = vld [vmem:[%s1392 + $0xe8] sm:$0xf]
    %v1423 = vld [vmem:[%s1392 + $0xf0] sm:$0xf]
    %v1424 = vld [vmem:[%s1392 + $0xf8] sm:$0xf]
    %s1425 = scalar_lea.vmem [#allocation3], 2560
    %v1426 = vld [vmem:[%s1425] sm:$0xf]
    %v1427 = vld [vmem:[%s1425 + $0x8] sm:$0xf]
    %v1428 = vld [vmem:[%s1425 + $0x10] sm:$0xf]
    %v1429 = vld [vmem:[%s1425 + $0x18] sm:$0xf]
    %v1430 = vld [vmem:[%s1425 + $0x20] sm:$0xf]
    %v1431 = vld [vmem:[%s1425 + $0x28] sm:$0xf]
    %v1432 = vld [vmem:[%s1425 + $0x30] sm:$0xf]
    %v1433 = vld [vmem:[%s1425 + $0x38] sm:$0xf]
    %v1434 = vld [vmem:[%s1425 + $0x40] sm:$0xf]
    %v1435 = vld [vmem:[%s1425 + $0x48] sm:$0xf]
    %v1436 = vld [vmem:[%s1425 + $0x50] sm:$0xf]
    %v1437 = vld [vmem:[%s1425 + $0x58] sm:$0xf]
    %v1438 = vld [vmem:[%s1425 + $0x60] sm:$0xf]
    %v1439 = vld [vmem:[%s1425 + $0x68] sm:$0xf]
    %v1440 = vld [vmem:[%s1425 + $0x70] sm:$0xf]
    %v1441 = vld [vmem:[%s1425 + $0x78] sm:$0xf]
    %v1442 = vld [vmem:[%s1425 + $0x80] sm:$0xf]
    %v1443 = vld [vmem:[%s1425 + $0x88] sm:$0xf]
    %v1444 = vld [vmem:[%s1425 + $0x90] sm:$0xf]
    %v1445 = vld [vmem:[%s1425 + $0x98] sm:$0xf]
    %v1446 = vld [vmem:[%s1425 + $0xa0] sm:$0xf]
    %v1447 = vld [vmem:[%s1425 + $0xa8] sm:$0xf]
    %v1448 = vld [vmem:[%s1425 + $0xb0] sm:$0xf]
    %v1449 = vld [vmem:[%s1425 + $0xb8] sm:$0xf]
    %v1450 = vld [vmem:[%s1425 + $0xc0] sm:$0xf]
    %v1451 = vld [vmem:[%s1425 + $0xc8] sm:$0xf]
    %v1452 = vld [vmem:[%s1425 + $0xd0] sm:$0xf]
    %v1453 = vld [vmem:[%s1425 + $0xd8] sm:$0xf]
    %v1454 = vld [vmem:[%s1425 + $0xe0] sm:$0xf]
    %v1455 = vld [vmem:[%s1425 + $0xe8] sm:$0xf]
    %v1456 = vld [vmem:[%s1425 + $0xf0] sm:$0xf]
    %v1457 = vld [vmem:[%s1425 + $0xf8] sm:$0xf]
    %v1490 = vunpack.c.l.b16 %v1426
    %v1491 = vunpack.c.l.b16 %v1427
    %v1492 = vunpack.c.l.b16 %v1428
    %v1493 = vunpack.c.l.b16 %v1429
    %v1494 = vunpack.c.l.b16 %v1430
    %v1495 = vunpack.c.l.b16 %v1431
    %v1496 = vunpack.c.l.b16 %v1432
    %v1497 = vunpack.c.l.b16 %v1433
    %v1498 = vunpack.c.l.b16 %v1434
    %v1499 = vunpack.c.l.b16 %v1435
    %v1500 = vunpack.c.l.b16 %v1436
    %v1501 = vunpack.c.l.b16 %v1437
    %v1502 = vunpack.c.l.b16 %v1438
    %v1503 = vunpack.c.l.b16 %v1439
    %v1504 = vunpack.c.l.b16 %v1440
    %v1505 = vunpack.c.l.b16 %v1441
    %v1506 = vunpack.c.l.b16 %v1442
    %v1507 = vunpack.c.l.b16 %v1443
    %v1508 = vunpack.c.l.b16 %v1444
    %v1509 = vunpack.c.l.b16 %v1445
    %v1510 = vunpack.c.l.b16 %v1446
    %v1511 = vunpack.c.l.b16 %v1447
    %v1512 = vunpack.c.l.b16 %v1448
    %v1513 = vunpack.c.l.b16 %v1449
    %v1514 = vunpack.c.l.b16 %v1450
    %v1515 = vunpack.c.l.b16 %v1451
    %v1516 = vunpack.c.l.b16 %v1452
    %v1517 = vunpack.c.l.b16 %v1453
    %v1518 = vunpack.c.l.b16 %v1454
    %v1519 = vunpack.c.l.b16 %v1455
    %v1520 = vunpack.c.l.b16 %v1456
    %v1521 = vunpack.c.l.b16 %v1457
    %v1522 = vpack.c.b16 %v1491, %v1490
    %v1523 = vpack.c.b16 %v1493, %v1492
    %v1524 = vpack.c.b16 %v1495, %v1494
    %v1525 = vpack.c.b16 %v1497, %v1496
    %v1526 = vpack.c.b16 %v1499, %v1498
    %v1527 = vpack.c.b16 %v1501, %v1500
    %v1528 = vpack.c.b16 %v1503, %v1502
    %v1529 = vpack.c.b16 %v1505, %v1504
    %v1530 = vpack.c.b16 %v1507, %v1506
    %v1531 = vpack.c.b16 %v1509, %v1508
    %v1532 = vpack.c.b16 %v1511, %v1510
    %v1533 = vpack.c.b16 %v1513, %v1512
    %v1534 = vpack.c.b16 %v1515, %v1514
    %v1535 = vpack.c.b16 %v1517, %v1516
    %v1536 = vpack.c.b16 %v1519, %v1518
    %v1537 = vpack.c.b16 %v1521, %v1520
    %1554 = vmatpush.bf16.msra.mxu0 %v1529
    %1555 = vmatpush.bf16.msra.mxu0 %v1528
    %1556 = vmatpush.bf16.msra.mxu0 %v1527
    %1557 = vmatpush.bf16.msra.mxu0 %v1526
    %1558 = vmatpush.bf16.msra.mxu0 %v1525
    %1559 = vmatpush.bf16.msra.mxu0 %v1524
    %1560 = vmatpush.bf16.msra.mxu0 %v1523
    %1561 = vmatpush.bf16.msra.mxu0 %v1522
    %1562 = vmatmul.bf16.gmra.mxu0 %v1371
    %v1563 = vpop.f32.mrf.mxu0
    %v1564 = vadd.f32 0.0, %v1563
    %v1565 = vpop.f32.mrf.mxu0
    %v1566 = vadd.f32 0.0, %v1565
    %1567 = vdwg.mxu0
    %1568 = vmatpush.bf16.msra.mxu0 %v1537
    %1569 = vmatpush.bf16.msra.mxu0 %v1536
    %1570 = vmatpush.bf16.msra.mxu0 %v1535
    %1571 = vmatpush.bf16.msra.mxu0 %v1534
    %1572 = vmatpush.bf16.msra.mxu0 %v1533
    %1573 = vmatpush.bf16.msra.mxu0 %v1532
    %1574 = vmatpush.bf16.msra.mxu0 %v1531
    %1575 = vmatpush.bf16.msra.mxu0 %v1530
    %1576 = vmatmul.bf16.gmra.mxu0 %v1372
    %v1577 = vpop.f32.mrf.mxu0
    %v1578 = vadd.f32 %v1564, %v1577
    %v1579 = vpop.f32.mrf.mxu0
    %v1580 = vadd.f32 %v1566, %v1579
    %1581 = vdwg.mxu0
    %v1614 = vunpack.c.l.b16 %v1393
    %v1615 = vunpack.c.l.b16 %v1394
    %v1616 = vunpack.c.l.b16 %v1395
    %v1617 = vunpack.c.l.b16 %v1396
    %v1618 = vunpack.c.l.b16 %v1397
    %v1619 = vunpack.c.l.b16 %v1398
    %v1620 = vunpack.c.l.b16 %v1399
    %v1621 = vunpack.c.l.b16 %v1400
    %v1622 = vunpack.c.l.b16 %v1401
    %v1623 = vunpack.c.l.b16 %v1402
    %v1624 = vunpack.c.l.b16 %v1403
    %v1625 = vunpack.c.l.b16 %v1404
    %v1626 = vunpack.c.l.b16 %v1405
    %v1627 = vunpack.c.l.b16 %v1406
    %v1628 = vunpack.c.l.b16 %v1407
    %v1629 = vunpack.c.l.b16 %v1408
    %v1630 = vunpack.c.l.b16 %v1409
    %v1631 = vunpack.c.l.b16 %v1410
    %v1632 = vunpack.c.l.b16 %v1411
    %v1633 = vunpack.c.l.b16 %v1412
    %v1634 = vunpack.c.l.b16 %v1413
    %v1635 = vunpack.c.l.b16 %v1414
    %v1636 = vunpack.c.l.b16 %v1415
    %v1637 = vunpack.c.l.b16 %v1416
    %v1638 = vunpack.c.l.b16 %v1417
    %v1639 = vunpack.c.l.b16 %v1418
    %v1640 = vunpack.c.l.b16 %v1419
    %v1641 = vunpack.c.l.b16 %v1420
    %v1642 = vunpack.c.l.b16 %v1421
    %v1643 = vunpack.c.l.b16 %v1422
    %v1644 = vunpack.c.l.b16 %v1423
    %v1645 = vunpack.c.l.b16 %v1424
    %v1646 = vpack.c.b16 %v1615, %v1614
    %v1647 = vpack.c.b16 %v1617, %v1616
    %v1648 = vpack.c.b16 %v1619, %v1618
    %v1649 = vpack.c.b16 %v1621, %v1620
    %v1650 = vpack.c.b16 %v1623, %v1622
    %v1651 = vpack.c.b16 %v1625, %v1624
    %v1652 = vpack.c.b16 %v1627, %v1626
    %v1653 = vpack.c.b16 %v1629, %v1628
    %v1654 = vpack.c.b16 %v1631, %v1630
    %v1655 = vpack.c.b16 %v1633, %v1632
    %v1656 = vpack.c.b16 %v1635, %v1634
    %v1657 = vpack.c.b16 %v1637, %v1636
    %v1658 = vpack.c.b16 %v1639, %v1638
    %v1659 = vpack.c.b16 %v1641, %v1640
    %v1660 = vpack.c.b16 %v1643, %v1642
    %v1661 = vpack.c.b16 %v1645, %v1644
    %1678 = vmatpush.bf16.msra.mxu0 %v1653
    %1679 = vmatpush.bf16.msra.mxu0 %v1652
    %1680 = vmatpush.bf16.msra.mxu0 %v1651
    %1681 = vmatpush.bf16.msra.mxu0 %v1650
    %1682 = vmatpush.bf16.msra.mxu0 %v1649
    %1683 = vmatpush.bf16.msra.mxu0 %v1648
    %1684 = vmatpush.bf16.msra.mxu0 %v1647
    %1685 = vmatpush.bf16.msra.mxu0 %v1646
    %1686 = vmatmul.bf16.gmra.mxu0 %v1390
    %v1687 = vpop.f32.mrf.mxu0
    %v1688 = vadd.f32 %v1578, %v1687
    %v1689 = vpop.f32.mrf.mxu0
    %v1690 = vadd.f32 %v1580, %v1689
    %1691 = vdwg.mxu0
    %1692 = vmatpush.bf16.msra.mxu0 %v1661
    %1693 = vmatpush.bf16.msra.mxu0 %v1660
    %1694 = vmatpush.bf16.msra.mxu0 %v1659
    %1695 = vmatpush.bf16.msra.mxu0 %v1658
    %1696 = vmatpush.bf16.msra.mxu0 %v1657
    %1697 = vmatpush.bf16.msra.mxu0 %v1656
    %1698 = vmatpush.bf16.msra.mxu0 %v1655
    %1699 = vmatpush.bf16.msra.mxu0 %v1654
    %1700 = vmatmul.bf16.gmra.mxu0 %v1391
    %v1701 = vpop.f32.mrf.mxu0
    %v1702 = vadd.f32 %v1688, %v1701
    %v1703 = vpop.f32.mrf.mxu0
    %v1704 = vadd.f32 %v1690, %v1703
    %1705 = vdwg.mxu0
    %v1706 = vperm.slane %v45, 5
    %v1707 = vadd.f32 %v1702, %v1706
    %v1708 = vadd.f32 %v1704, %v1706
    %v1709 = vmax.f32 %v1707, 0.0
    %v1710 = vmax.f32 %v1708, 0.0
    %v1711 = vpack.c.bf16 %v1710, %v1709
    %v1712 = vrot.slane %v1709, 4
    %v1713 = vrot.slane %v1710, 4
    %v1714 = vsel %vm1377, %v1712, %v1713
    %v1715 = vsel %vm1377, %v1713, %v1712
    %v1716 = vsel %vm1384, %v1715, 0.0
    %v1717 = vsel %vm1385, %v1714, 0.0
    %v1718 = vpack.c.bf16 %v1717, %v1716
    %s1719 = scalar_lea.vmem [#allocation3], 2816
    %v1720 = vld [vmem:[%s1719] sm:$0xf]
    %v1721 = vld [vmem:[%s1719 + $0x8] sm:$0xf]
    %v1722 = vld [vmem:[%s1719 + $0x10] sm:$0xf]
    %v1723 = vld [vmem:[%s1719 + $0x18] sm:$0xf]
    %v1724 = vld [vmem:[%s1719 + $0x20] sm:$0xf]
    %v1725 = vld [vmem:[%s1719 + $0x28] sm:$0xf]
    %v1726 = vld [vmem:[%s1719 + $0x30] sm:$0xf]
    %v1727 = vld [vmem:[%s1719 + $0x38] sm:$0xf]
    %v1728 = vld [vmem:[%s1719 + $0x40] sm:$0xf]
    %v1729 = vld [vmem:[%s1719 + $0x48] sm:$0xf]
    %v1730 = vld [vmem:[%s1719 + $0x50] sm:$0xf]
    %v1731 = vld [vmem:[%s1719 + $0x58] sm:$0xf]
    %v1732 = vld [vmem:[%s1719 + $0x60] sm:$0xf]
    %v1733 = vld [vmem:[%s1719 + $0x68] sm:$0xf]
    %v1734 = vld [vmem:[%s1719 + $0x70] sm:$0xf]
    %v1735 = vld [vmem:[%s1719 + $0x78] sm:$0xf]
    %s1736 = scalar_lea.vmem [#allocation3], 3072
    %v1737 = vld [vmem:[%s1736] sm:$0xf]
    %v1738 = vld [vmem:[%s1736 + $0x8] sm:$0xf]
    %v1739 = vld [vmem:[%s1736 + $0x10] sm:$0xf]
    %v1740 = vld [vmem:[%s1736 + $0x18] sm:$0xf]
    %v1741 = vld [vmem:[%s1736 + $0x20] sm:$0xf]
    %v1742 = vld [vmem:[%s1736 + $0x28] sm:$0xf]
    %v1743 = vld [vmem:[%s1736 + $0x30] sm:$0xf]
    %v1744 = vld [vmem:[%s1736 + $0x38] sm:$0xf]
    %v1745 = vld [vmem:[%s1736 + $0x40] sm:$0xf]
    %v1746 = vld [vmem:[%s1736 + $0x48] sm:$0xf]
    %v1747 = vld [vmem:[%s1736 + $0x50] sm:$0xf]
    %v1748 = vld [vmem:[%s1736 + $0x58] sm:$0xf]
    %v1749 = vld [vmem:[%s1736 + $0x60] sm:$0xf]
    %v1750 = vld [vmem:[%s1736 + $0x68] sm:$0xf]
    %v1751 = vld [vmem:[%s1736 + $0x70] sm:$0xf]
    %v1752 = vld [vmem:[%s1736 + $0x78] sm:$0xf]
    %v1769 = vunpack.c.l.b16 %v1737
    %v1770 = vunpack.c.l.b16 %v1738
    %v1771 = vunpack.c.l.b16 %v1739
    %v1772 = vunpack.c.l.b16 %v1740
    %v1773 = vunpack.c.l.b16 %v1741
    %v1774 = vunpack.c.l.b16 %v1742
    %v1775 = vunpack.c.l.b16 %v1743
    %v1776 = vunpack.c.l.b16 %v1744
    %v1777 = vunpack.c.l.b16 %v1745
    %v1778 = vunpack.c.l.b16 %v1746
    %v1779 = vunpack.c.l.b16 %v1747
    %v1780 = vunpack.c.l.b16 %v1748
    %v1781 = vunpack.c.l.b16 %v1749
    %v1782 = vunpack.c.l.b16 %v1750
    %v1783 = vunpack.c.l.b16 %v1751
    %v1784 = vunpack.c.l.b16 %v1752
    %v1785 = vpack.c.b16 %v1770, %v1769
    %v1786 = vpack.c.b16 %v1772, %v1771
    %v1787 = vpack.c.b16 %v1774, %v1773
    %v1788 = vpack.c.b16 %v1776, %v1775
    %v1789 = vpack.c.b16 %v1778, %v1777
    %v1790 = vpack.c.b16 %v1780, %v1779
    %v1791 = vpack.c.b16 %v1782, %v1781
    %v1792 = vpack.c.b16 %v1784, %v1783
    %1801 = vmatpush.bf16.msra.mxu0 %v1792
    %1802 = vmatpush.bf16.msra.mxu0 %v1791
    %1803 = vmatpush.bf16.msra.mxu0 %v1790
    %1804 = vmatpush.bf16.msra.mxu0 %v1789
    %1805 = vmatpush.bf16.msra.mxu0 %v1788
    %1806 = vmatpush.bf16.msra.mxu0 %v1787
    %1807 = vmatpush.bf16.msra.mxu0 %v1786
    %1808 = vmatpush.bf16.msra.mxu0 %v1785
    %1809 = vmatmul.bf16.gmra.mxu0 %v1711
    %v1810 = vpop.f32.mrf.mxu0
    %v1811 = vadd.f32 0.0, %v1810
    %v1812 = vpop.f32.mrf.mxu0
    %v1813 = vadd.f32 0.0, %v1812
    %1814 = vdwg.mxu0
    %v1831 = vunpack.c.l.b16 %v1720
    %v1832 = vunpack.c.l.b16 %v1721
    %v1833 = vunpack.c.l.b16 %v1722
    %v1834 = vunpack.c.l.b16 %v1723
    %v1835 = vunpack.c.l.b16 %v1724
    %v1836 = vunpack.c.l.b16 %v1725
    %v1837 = vunpack.c.l.b16 %v1726
    %v1838 = vunpack.c.l.b16 %v1727
    %v1839 = vunpack.c.l.b16 %v1728
    %v1840 = vunpack.c.l.b16 %v1729
    %v1841 = vunpack.c.l.b16 %v1730
    %v1842 = vunpack.c.l.b16 %v1731
    %v1843 = vunpack.c.l.b16 %v1732
    %v1844 = vunpack.c.l.b16 %v1733
    %v1845 = vunpack.c.l.b16 %v1734
    %v1846 = vunpack.c.l.b16 %v1735
    %v1847 = vpack.c.b16 %v1832, %v1831
    %v1848 = vpack.c.b16 %v1834, %v1833
    %v1849 = vpack.c.b16 %v1836, %v1835
    %v1850 = vpack.c.b16 %v1838, %v1837
    %v1851 = vpack.c.b16 %v1840, %v1839
    %v1852 = vpack.c.b16 %v1842, %v1841
    %v1853 = vpack.c.b16 %v1844, %v1843
    %v1854 = vpack.c.b16 %v1846, %v1845
    %1863 = vmatpush.bf16.msra.mxu0 %v1854
    %1864 = vmatpush.bf16.msra.mxu0 %v1853
    %1865 = vmatpush.bf16.msra.mxu0 %v1852
    %1866 = vmatpush.bf16.msra.mxu0 %v1851
    %1867 = vmatpush.bf16.msra.mxu0 %v1850
    %1868 = vmatpush.bf16.msra.mxu0 %v1849
    %1869 = vmatpush.bf16.msra.mxu0 %v1848
    %1870 = vmatpush.bf16.msra.mxu0 %v1847
    %1871 = vmatmul.bf16.gmra.mxu0 %v1718
    %v1872 = vpop.f32.mrf.mxu0
    %v1873 = vadd.f32 %v1811, %v1872
    %v1874 = vpop.f32.mrf.mxu0
    %v1875 = vadd.f32 %v1813, %v1874
    %1876 = vdwg.mxu0
    %v1877 = vperm.slane %v45, 6
    %v1878 = vadd.f32 %v1873, %v1877
    %v1879 = vadd.f32 %v1875, %v1877
    %v1880 = vmax.f32 %v1878, 0.0
    %v1881 = vmax.f32 %v1879, 0.0
    %s1882 = scalar_lea.vmem [#allocation3], 3328
    %v1883 = vld [vmem:[%s1882] sm:$0xf]
    %v1884 = vld [vmem:[%s1882 + $0x8] sm:$0xf]
    %v1885 = vld [vmem:[%s1882 + $0x10] sm:$0xf]
    %v1886 = vld [vmem:[%s1882 + $0x18] sm:$0xf]
    %v1887 = vld [vmem:[%s1882 + $0x20] sm:$0xf]
    %v1888 = vld [vmem:[%s1882 + $0x28] sm:$0xf]
    %v1889 = vld [vmem:[%s1882 + $0x30] sm:$0xf]
    %v1890 = vld [vmem:[%s1882 + $0x38] sm:$0xf]
    %v1891 = vld [vmem:[%s1882 + $0x40] sm:$0xf]
    %v1892 = vld [vmem:[%s1882 + $0x48] sm:$0xf]
    %v1893 = vld [vmem:[%s1882 + $0x50] sm:$0xf]
    %v1894 = vld [vmem:[%s1882 + $0x58] sm:$0xf]
    %v1895 = vld [vmem:[%s1882 + $0x60] sm:$0xf]
    %v1896 = vld [vmem:[%s1882 + $0x68] sm:$0xf]
    %v1897 = vld [vmem:[%s1882 + $0x70] sm:$0xf]
    %v1898 = vld [vmem:[%s1882 + $0x78] sm:$0xf]
    %v1899 = vld [vmem:[%s1882 + $0x80] sm:$0xf]
    %v1900 = vld [vmem:[%s1882 + $0x88] sm:$0xf]
    %v1901 = vld [vmem:[%s1882 + $0x90] sm:$0xf]
    %v1902 = vld [vmem:[%s1882 + $0x98] sm:$0xf]
    %v1903 = vld [vmem:[%s1882 + $0xa0] sm:$0xf]
    %v1904 = vld [vmem:[%s1882 + $0xa8] sm:$0xf]
    %v1905 = vld [vmem:[%s1882 + $0xb0] sm:$0xf]
    %v1906 = vld [vmem:[%s1882 + $0xb8] sm:$0xf]
    %v1907 = vld [vmem:[%s1882 + $0xc0] sm:$0xf]
    %v1908 = vld [vmem:[%s1882 + $0xc8] sm:$0xf]
    %v1909 = vld [vmem:[%s1882 + $0xd0] sm:$0xf]
    %v1910 = vld [vmem:[%s1882 + $0xd8] sm:$0xf]
    %v1911 = vld [vmem:[%s1882 + $0xe0] sm:$0xf]
    %v1912 = vld [vmem:[%s1882 + $0xe8] sm:$0xf]
    %v1913 = vld [vmem:[%s1882 + $0xf0] sm:$0xf]
    %v1914 = vld [vmem:[%s1882 + $0xf8] sm:$0xf]
    %v1915 = vperm.slane %v45, 7
    %v1948 = vunpack.c.l.b16 %v1883
    %v1949 = vunpack.c.l.b16 %v1884
    %v1950 = vunpack.c.l.b16 %v1885
    %v1951 = vunpack.c.l.b16 %v1886
    %v1952 = vunpack.c.l.b16 %v1887
    %v1953 = vunpack.c.l.b16 %v1888
    %v1954 = vunpack.c.l.b16 %v1889
    %v1955 = vunpack.c.l.b16 %v1890
    %v1956 = vunpack.c.l.b16 %v1891
    %v1957 = vunpack.c.l.b16 %v1892
    %v1958 = vunpack.c.l.b16 %v1893
    %v1959 = vunpack.c.l.b16 %v1894
    %v1960 = vunpack.c.l.b16 %v1895
    %v1961 = vunpack.c.l.b16 %v1896
    %v1962 = vunpack.c.l.b16 %v1897
    %v1963 = vunpack.c.l.b16 %v1898
    %v1964 = vunpack.c.l.b16 %v1899
    %v1965 = vunpack.c.l.b16 %v1900
    %v1966 = vunpack.c.l.b16 %v1901
    %v1967 = vunpack.c.l.b16 %v1902
    %v1968 = vunpack.c.l.b16 %v1903
    %v1969 = vunpack.c.l.b16 %v1904
    %v1970 = vunpack.c.l.b16 %v1905
    %v1971 = vunpack.c.l.b16 %v1906
    %v1972 = vunpack.c.l.b16 %v1907
    %v1973 = vunpack.c.l.b16 %v1908
    %v1974 = vunpack.c.l.b16 %v1909
    %v1975 = vunpack.c.l.b16 %v1910
    %v1976 = vunpack.c.l.b16 %v1911
    %v1977 = vunpack.c.l.b16 %v1912
    %v1978 = vunpack.c.l.b16 %v1913
    %v1979 = vunpack.c.l.b16 %v1914
    %v1980 = vpack.c.b16 %v1949, %v1948
    %v1981 = vpack.c.b16 %v1951, %v1950
    %v1982 = vpack.c.b16 %v1953, %v1952
    %v1983 = vpack.c.b16 %v1955, %v1954
    %v1984 = vpack.c.b16 %v1957, %v1956
    %v1985 = vpack.c.b16 %v1959, %v1958
    %v1986 = vpack.c.b16 %v1961, %v1960
    %v1987 = vpack.c.b16 %v1963, %v1962
    %v1988 = vpack.c.b16 %v1965, %v1964
    %v1989 = vpack.c.b16 %v1967, %v1966
    %v1990 = vpack.c.b16 %v1969, %v1968
    %v1991 = vpack.c.b16 %v1971, %v1970
    %v1992 = vpack.c.b16 %v1973, %v1972
    %v1993 = vpack.c.b16 %v1975, %v1974
    %v1994 = vpack.c.b16 %v1977, %v1976
    %v1995 = vpack.c.b16 %v1979, %v1978
    %2012 = vmatpush.bf16.msra.mxu0 %v1987
    %2013 = vmatpush.bf16.msra.mxu0 %v1986
    %2014 = vmatpush.bf16.msra.mxu0 %v1985
    %2015 = vmatpush.bf16.msra.mxu0 %v1984
    %2016 = vmatpush.bf16.msra.mxu0 %v1983
    %2017 = vmatpush.bf16.msra.mxu0 %v1982
    %2018 = vmatpush.bf16.msra.mxu0 %v1981
    %2019 = vmatpush.bf16.msra.mxu0 %v1980
    %2020 = vmatmul.bf16.gmra.mxu0 %v1371
    %v2021 = vpop.f32.mrf.mxu0
    %v2022 = vadd.f32 %v1915, %v2021
    %v2023 = vpop.f32.mrf.mxu0
    %v2024 = vadd.f32 %v1915, %v2023
    %2025 = vdwg.mxu0
    %2026 = vmatpush.bf16.msra.mxu0 %v1995
    %2027 = vmatpush.bf16.msra.mxu0 %v1994
    %2028 = vmatpush.bf16.msra.mxu0 %v1993
    %2029 = vmatpush.bf16.msra.mxu0 %v1992
    %2030 = vmatpush.bf16.msra.mxu0 %v1991
    %2031 = vmatpush.bf16.msra.mxu0 %v1990
    %2032 = vmatpush.bf16.msra.mxu0 %v1989
    %2033 = vmatpush.bf16.msra.mxu0 %v1988
    %2034 = vmatmul.bf16.gmra.mxu0 %v1372
    %v2035 = vpop.f32.mrf.mxu0
    %v2036 = vadd.f32 %v2022, %v2035
    %v2037 = vpop.f32.mrf.mxu0
    %v2038 = vadd.f32 %v2024, %v2037
    %2039 = vdwg.mxu0
    %v2040 = vadd.f32 %v1880, %v2036
    %v2041 = vadd.f32 %v1881, %v2038
    %v2042 = vmax.f32 %v2040, 0.0
    %v2043 = vmax.f32 %v2041, 0.0
    %2044 = vst [vmem:[#allocation8] sm:$0xff] %v2042
    %2045 = vst [vmem:[#allocation8 + $0x8] sm:$0xff] %v2043
    // Predicated region
    $region22: #{stformer_forward.1} parent=1 // pred_check
      _
    $region23: #{stformer_forward.1} parent=1 // pred_check_branch
      %2047 = sbr.rel (0) target = $region25
    $region24: #{stformer_forward.1} parent=1 // pred_region
      %2049 = vsyncadd [#allocation5], 0
      %s2050 = sshll.u32 [#allocation8], 4
      %s2051 = int_to_ptr.vmem [resolvable:$true] %s2050
      %s2052 = sshll.u32 %s3, 4
      %s2053 = int_to_ptr.hbm [resolvable:$true] %s2052
      %2058 = dma.vmem_to_hbm [thread:$0]  %s2051, 256, %s2053, [#allocation5], 128, 128, 8
    $region25: #{stformer_forward.1} parent=1 // pred_fallthru
      _
    // Predicated region
    $region26: #{stformer_forward.1} parent=1 // pred_check
      _
    $region27: #{stformer_forward.1} parent=1 // pred_check_branch
      %2060 = sbr.rel (0) target = $region29
    $region28: #{stformer_forward.1} parent=1 // pred_region
      %2062 = dma.done [#allocation5], 256
    $region29: #{stformer_forward.1} parent=1 // pred_fallthru
      _
    %2063 = vsyncpa [#allocation4], 1
    %2064 = vsyncpa [#allocation7], 1
    %2065 = vsyncpa [#allocation5], 1

</llo_original>
